<compile_context>
chip_gen: v7x
topology: tpu7x:2x2x1
jax: 0.10.0
libtpu: 0.0.40
codegen_flags: <defaults>
</compile_context>

<pallas_src>
import jax
import jax.numpy as jnp
from jax import lax
from jax.experimental import pallas as pl
from jax.experimental.pallas import tpu as pltpu


def _round_up(x, m):
    return (x + m - 1) // m * m


def _pick_time_chunk(T, Bb, Hp, act_bytes, whh_bytes, with_outputs,
                     budget_bytes=24 * 1024 * 1024, max_unrolled=64):
    """Largest time chunk whose (double-buffered) VMEM footprint fits the budget."""
    fixed = 2 * Hp * Hp * whh_bytes + Bb * Hp * 4      # W_hh buffers + f32 h scratch
    avail = max(budget_bytes - fixed, 1 << 16)
    n_bufs = 2 + (2 if with_outputs else 0)            # z (double-buf) [+ outputs]
    per_step = Bb * Hp * act_bytes * n_bufs
    return int(max(1, min(T, avail // per_step, max_unrolled)))


def _make_rnn_kernel(t_valid, chunk, with_outputs):
    """Recurrence kernel for one layer / one time-chunk per grid step.

    Refs: z (tc,Bb,Hp), W_hh^T (Hp,Hp), out (per-timestep (tc,Bb,Hp) if
    with_outputs else final hidden (Bb,Hp)), h_scratch (Bb,Hp) f32.
    """
    needs_mask = (t_valid % chunk) != 0
    unroll = True if chunk <= 16 else 8

    def kernel(z_ref, whh_ref, out_ref, h_scratch):
        c = pl.program_id(1)           # time-chunk index (innermost, "arbitrary")
        tc = z_ref.shape[0]

        @pl.when(c == 0)
        def _():
            h_scratch[...] = jnp.zeros_like(h_scratch)

        w = whh_ref[...]               # hoisted above the step loop
        base = c * tc

        def step(i, h):
            h_new = jnp.tanh(
                z_ref[i].astype(jnp.float32)
                + jnp.dot(h.astype(w.dtype), w,
                          preferred_element_type=jnp.float32))
            if needs_mask:
                # Padded (out-of-range) timesteps must not update the carry.
                h_new = jnp.where(base + i < t_valid, h_new, h)
            if with_outputs:
                out_ref[i] = h_new.astype(out_ref.dtype)
            return h_new

        h_last = lax.fori_loop(0, tc, step, h_scratch[...], unroll=unroll)
        h_scratch[...] = h_last

        if not with_outputs:
            @pl.when(c == pl.num_programs(1) - 1)
            def _():
                out_ref[...] = h_last.astype(out_ref.dtype)

    return kernel


def _run_rnn_layer(x, w_ih, w_hh, bias, *, return_outputs,
                   act_dtype=jnp.bfloat16):
    """One RNN(tanh) layer.  x: (T, Bp, D), weights already padded to Hp.

    Returns per-timestep hidden states (T, Bp, Hp) in act_dtype when
    return_outputs, else only the final hidden state (Bp, Hp) in f32.
    """
    T, Bp, D = x.shape
    Hp = w_ih.shape[0]

    # Hoisted input projection: one big parallel MXU matmul in XLA, merged bias.
    z = (jnp.dot(x.reshape(T * Bp, D).astype(jnp.float32), jnp.transpose(w_ih),
                 preferred_element_type=jnp.float32)
         + bias).reshape(T, Bp, Hp).astype(act_dtype)

    # Recurrent weight: f32 for small H (negligible MXU cost, no compounded
    # rounding over long sequences), bf16 for large H.
    whh_dtype = jnp.float32 if Hp <= 512 else jnp.bfloat16
    whh_t = jnp.transpose(w_hh).astype(whh_dtype)

    # Batch split across TensorCores (helps v7x); only when blocks stay >=16.
    nb = 2 if (Bp >= 32 and Bp % 16 == 0) else 1
    Bb = Bp // nb

    act_bytes = jnp.dtype(act_dtype).itemsize
    tc = _pick_time_chunk(T, Bb, Hp, act_bytes, jnp.dtype(whh_dtype).itemsize,
                          with_outputs=return_outputs)
    nt = pl.cdiv(T, tc)
    T_pad = nt * tc
    if T_pad != T:
        z = jnp.pad(z, ((0, T_pad - T), (0, 0), (0, 0)))

    if return_outputs:
        out_shape = jax.ShapeDtypeStruct((T_pad, Bp, Hp), act_dtype)
        out_spec = pl.BlockSpec((tc, Bb, Hp), lambda b, c: (c, b, 0))
    else:
        out_shape = jax.ShapeDtypeStruct((Bp, Hp), jnp.float32)
        out_spec = pl.BlockSpec((Bb, Hp), lambda b, c: (b, 0))

    out = pl.pallas_call(
        _make_rnn_kernel(T, tc, return_outputs),
        out_shape=out_shape,
        grid_spec=pltpu.PrefetchScalarGridSpec(
            num_scalar_prefetch=0,
            grid=(nb, nt),
            in_specs=[
                pl.BlockSpec((tc, Bb, Hp), lambda b, c: (c, b, 0)),  # z chunk
                pl.BlockSpec((Hp, Hp), lambda b, c: (0, 0)),         # W_hh^T
            ],
            out_specs=out_spec,
            scratch_shapes=[pltpu.VMEM((Bb, Hp), jnp.float32)],
        ),
        compiler_params=pltpu.CompilerParams(
            dimension_semantics=("parallel", "arbitrary"),
            vmem_limit_bytes=32 * 1024 * 1024,
        ),
    )(z, whh_t)

    if return_outputs:
        return out[:T]
    return out


class EncoderRNN:
    """JAX/Pallas equivalent of the PyTorch Encoder_rnn module (eval semantics)."""

    def __init__(self, input_dim, hid_dim, n_layers, dropout, key):
        self.input_dim = input_dim
        self.hid_dim = hid_dim
        self.n_layers = n_layers
        self.dropout = dropout  # identity at inference
        self.params = []
        k = 1.0 / float(hid_dim) ** 0.5
        for layer in range(n_layers):
            d_in = input_dim if layer == 0 else hid_dim
            key, k1, k2, k3, k4 = jax.random.split(key, 5)
            w_ih = jax.random.uniform(k1, (hid_dim, d_in), jnp.float32, -k, k)
            w_hh = jax.random.uniform(k2, (hid_dim, hid_dim), jnp.float32, -k, k)
            b_ih = jax.random.uniform(k3, (hid_dim,), jnp.float32, -k, k)
            b_hh = jax.random.uniform(k4, (hid_dim,), jnp.float32, -k, k)
            self.params.append((w_ih, w_hh, b_ih, b_hh))

    def __call__(self, src):
        # src: (T, B, input_dim); dropout(src) == src in eval mode.
        T, B, _ = src.shape
        H = self.hid_dim
        Hp = _round_up(max(H, 128), 128)   # lane-dense hidden dim
        Bp = _round_up(max(B, 8), 8)       # sublane-aligned batch

        x = src
        if Bp != B:
            x = jnp.pad(x, ((0, 0), (0, Bp - B), (0, 0)))

        hiddens = []
        for layer, (w_ih, w_hh, b_ih, b_hh) in enumerate(self.params):
            d_in = w_ih.shape[1]
            d_in_p = x.shape[2]
            # Zero padding is exact: padded hidden columns stay identically 0.
            w_ih_p = jnp.pad(w_ih, ((0, Hp - H), (0, d_in_p - d_in)))
            w_hh_p = jnp.pad(w_hh, ((0, Hp - H), (0, Hp - H)))
            bias_p = jnp.pad(b_ih + b_hh, (0, Hp - H))

            is_last = layer == self.n_layers - 1
            if is_last:
                # Skip materializing the (T, B, H) outputs nobody reads.
                h_last = _run_rnn_layer(x, w_ih_p, w_hh_p, bias_p,
                                        return_outputs=False)
            else:
                outs = _run_rnn_layer(x, w_ih_p, w_hh_p, bias_p,
                                      return_outputs=True)
                h_last = outs[T - 1].astype(jnp.float32)
                x = outs
            hiddens.append(h_last)

        hidden = jnp.stack(hiddens, axis=0)       # (n_layers, Bp, Hp)
        return hidden[:, :B, :H]                  # trim padding


if __name__ == "__main__":
    # src of shape (seq_len, batch, input_dim), matching nn.RNN defaults.
    seq_len, batch, input_dim, hid_dim, n_layers = 16, 4, 16, 32, 2

    key = jax.random.PRNGKey(0)
    key, k_src, k_params = jax.random.split(key, 3)
    src = jax.random.normal(k_src, (seq_len, batch, input_dim), jnp.float32)

    enc = EncoderRNN(input_dim, hid_dim, n_layers, dropout=0.0, key=k_params)

    hidden = jax.block_until_ready(enc(src))
    assert hidden.shape == (n_layers, batch, hid_dim)
    assert bool(jnp.all(jnp.isfinite(hidden)))

    # Pure-JAX reference of the exact f32 recurrence (loose tolerance: the
    # kernel stores z / inter-layer activations in bf16).
    def ref_forward(src, params):
        x = src
        hs = []
        for (w_ih, w_hh, b_ih, b_hh) in params:
            h = jnp.zeros((x.shape[1], w_ih.shape[0]), jnp.float32)
            outs = []
            for t in range(x.shape[0]):
                h = jnp.tanh(x[t] @ w_ih.T + b_ih + h @ w_hh.T + b_hh)
                outs.append(h)
            x = jnp.stack(outs, axis=0)
            hs.append(h)
        return jnp.stack(hs, axis=0)

    ref = ref_forward(src, enc.params)
    max_err = float(jnp.max(jnp.abs(hidden - ref)))
    assert max_err < 0.1, max_err
    print("KERNEL_OK")
</pallas_src>

<mosaic_0001>
module attributes {stable_mosaic.version = 11 : i64} {
  func.func @kernel(%arg0: i32, %arg1: i32, %arg2: memref<16x8x128xbf16, #tpu.memory_space<vmem>>, %arg3: memref<128x128xf32, #tpu.memory_space<vmem>>, %arg4: memref<16x8x128xbf16, #tpu.memory_space<vmem>>, %arg5: memref<8x128xf32, #tpu.memory_space<vmem>>) attributes {dimension_semantics = [#tpu.dimension_semantics<parallel>, #tpu.dimension_semantics<arbitrary>], iteration_bounds = array<i64: 1, 1>, scalar_prefetch = 0 : i64, scratch_operands = 1 : i64, tpu.core_type = #tpu.core_type<tc>, window_params = [{transform_indices = @transform_0, window_bounds = array<i64: 16, 8, 128>}, {pipeline_mode = #tpu.pipeline_mode<synchronous>, transform_indices = @transform_1, window_bounds = array<i64: 128, 128>}, {transform_indices = @transform_2, window_bounds = array<i64: 16, 8, 128>}]} {
    %c0_i32 = arith.constant 0 : i32
    %0 = arith.cmpi eq, %arg1, %c0_i32 : i32
    %1 = arith.extui %0 : i1 to i32
    %c0_i32_0 = arith.constant 0 : i32
    %2 = arith.cmpi ne, %1, %c0_i32_0 : i32
    scf.if %2 {
      %cst_86 = arith.constant 0.000000e+00 : f32
      %198 = vector.broadcast %cst_86 : f32 to vector<8x128xf32>
      %c0_87 = arith.constant 0 : index
      %c0_88 = arith.constant 0 : index
      %199 = vector.load %arg5[%c0_87, %c0_88] : memref<8x128xf32, #tpu.memory_space<vmem>>, vector<8x128xf32>
      tpu.vector_store %arg5[%c0_87, %c0_88], %198 {strides = array<i32>} : memref<8x128xf32, #tpu.memory_space<vmem>>, vector<8x128xf32>,
    } else {
    }
    %c0 = arith.constant 0 : index
    %c0_1 = arith.constant 0 : index
    %3 = vector.load %arg3[%c0, %c0_1] : memref<128x128xf32, #tpu.memory_space<vmem>>, vector<128x128xf32>
    %c0_2 = arith.constant 0 : index
    %c0_3 = arith.constant 0 : index
    %4 = vector.load %arg5[%c0_2, %c0_3] : memref<8x128xf32, #tpu.memory_space<vmem>>, vector<8x128xf32>
    %c0_i32_4 = arith.constant 0 : i32
    %5 = arith.index_cast %c0_i32_4 : i32 to index
    %c0_5 = arith.constant 0 : index
    %c0_6 = arith.constant 0 : index
    %6 = vector.load %arg2[%5, %c0_5, %c0_6] : memref<16x8x128xbf16, #tpu.memory_space<vmem>>, vector<1x8x128xbf16>
    %7 = vector.shape_cast %6 : vector<1x8x128xbf16> to vector<8x128xbf16>
    %8 = arith.extf %7 : vector<8x128xbf16> to vector<8x128xf32>
    %cst = arith.constant dense<0.000000e+00> : vector<8x128xf32>
    %9 = tpu.matmul %4, %3, %cst {dimension_numbers = #tpu.dot_dimension_numbers<[1], [0], [0], [1], [0, 0, 1, 1], [], []>} : vector<8x128xf32>, vector<128x128xf32>, vector<8x128xf32> -> vector<8x128xf32>
    %10 = arith.addf %8, %9 : vector<8x128xf32>
    %11 = math.tanh %10 : vector<8x128xf32>
    %12 = arith.truncf %11 : vector<8x128xf32> to vector<8x128xbf16>
    %13 = arith.index_cast %c0_i32_4 : i32 to index
    %c0_7 = arith.constant 0 : index
    %c0_8 = arith.constant 0 : index
    %14 = vector.load %arg4[%13, %c0_7, %c0_8] : memref<16x8x128xbf16, #tpu.memory_space<vmem>>, vector<1x8x128xbf16>
    %15 = vector.shape_cast %14 : vector<1x8x128xbf16> to vector<8x128xbf16>
    %16 = vector.shape_cast %12 : vector<8x128xbf16> to vector<1x8x128xbf16>
    tpu.vector_store %arg4[%13, %c0_7, %c0_8], %16 {strides = array<i32>} : memref<16x8x128xbf16, #tpu.memory_space<vmem>>, vector<1x8x128xbf16>,
    %c1_i32 = arith.constant 1 : i32
    %17 = arith.index_cast %c1_i32 : i32 to index
    %c0_9 = arith.constant 0 : index
    %c0_10 = arith.constant 0 : index
    %18 = vector.load %arg2[%17, %c0_9, %c0_10] : memref<16x8x128xbf16, #tpu.memory_space<vmem>>, vector<1x8x128xbf16>
    %19 = vector.shape_cast %18 : vector<1x8x128xbf16> to vector<8x128xbf16>
    %20 = arith.extf %19 : vector<8x128xbf16> to vector<8x128xf32>
    %cst_11 = arith.constant dense<0.000000e+00> : vector<8x128xf32>
    %21 = tpu.matmul %11, %3, %cst_11 {dimension_numbers = #tpu.dot_dimension_numbers<[1], [0], [0], [1], [0, 0, 1, 1], [], []>} : vector<8x128xf32>, vector<128x128xf32>, vector<8x128xf32> -> vector<8x128xf32>
    %22 = arith.addf %20, %21 : vector<8x128xf32>
    %23 = math.tanh %22 : vector<8x128xf32>
    %24 = arith.truncf %23 : vector<8x128xf32> to vector<8x128xbf16>
    %25 = arith.index_cast %c1_i32 : i32 to index
    %c0_12 = arith.constant 0 : index
    %c0_13 = arith.constant 0 : index
    %26 = vector.load %arg4[%25, %c0_12, %c0_13] : memref<16x8x128xbf16, #tpu.memory_space<vmem>>, vector<1x8x128xbf16>
    %27 = vector.shape_cast %26 : vector<1x8x128xbf16> to vector<8x128xbf16>
    %28 = vector.shape_cast %24 : vector<8x128xbf16> to vector<1x8x128xbf16>
    tpu.vector_store %arg4[%25, %c0_12, %c0_13], %28 {strides = array<i32>} : memref<16x8x128xbf16, #tpu.memory_space<vmem>>, vector<1x8x128xbf16>,
    %c2_i32 = arith.constant 2 : i32
    %29 = arith.index_cast %c2_i32 : i32 to index
    %c0_14 = arith.constant 0 : index
    %c0_15 = arith.constant 0 : index
    %30 = vector.load %arg2[%29, %c0_14, %c0_15] : memref<16x8x128xbf16, #tpu.memory_space<vmem>>, vector<1x8x128xbf16>
    %31 = vector.shape_cast %30 : vector<1x8x128xbf16> to vector<8x128xbf16>
    %32 = arith.extf %31 : vector<8x128xbf16> to vector<8x128xf32>
    %cst_16 = arith.constant dense<0.000000e+00> : vector<8x128xf32>
    %33 = tpu.matmul %23, %3, %cst_16 {dimension_numbers = #tpu.dot_dimension_numbers<[1], [0], [0], [1], [0, 0, 1, 1], [], []>} : vector<8x128xf32>, vector<128x128xf32>, vector<8x128xf32> -> vector<8x128xf32>
    %34 = arith.addf %32, %33 : vector<8x128xf32>
    %35 = math.tanh %34 : vector<8x128xf32>
    %36 = arith.truncf %35 : vector<8x128xf32> to vector<8x128xbf16>
    %37 = arith.index_cast %c2_i32 : i32 to index
    %c0_17 = arith.constant 0 : index
    %c0_18 = arith.constant 0 : index
    %38 = vector.load %arg4[%37, %c0_17, %c0_18] : memref<16x8x128xbf16, #tpu.memory_space<vmem>>, vector<1x8x128xbf16>
    %39 = vector.shape_cast %38 : vector<1x8x128xbf16> to vector<8x128xbf16>
    %40 = vector.shape_cast %36 : vector<8x128xbf16> to vector<1x8x128xbf16>
    tpu.vector_store %arg4[%37, %c0_17, %c0_18], %40 {strides = array<i32>} : memref<16x8x128xbf16, #tpu.memory_space<vmem>>, vector<1x8x128xbf16>,
    %c3_i32 = arith.constant 3 : i32
    %41 = arith.index_cast %c3_i32 : i32 to index
    %c0_19 = arith.constant 0 : index
    %c0_20 = arith.constant 0 : index
    %42 = vector.load %arg2[%41, %c0_19, %c0_20] : memref<16x8x128xbf16, #tpu.memory_space<vmem>>, vector<1x8x128xbf16>
    %43 = vector.shape_cast %42 : vector<1x8x128xbf16> to vector<8x128xbf16>
    %44 = arith.extf %43 : vector<8x128xbf16> to vector<8x128xf32>
    %cst_21 = arith.constant dense<0.000000e+00> : vector<8x128xf32>
    %45 = tpu.matmul %35, %3, %cst_21 {dimension_numbers = #tpu.dot_dimension_numbers<[1], [0], [0], [1], [0, 0, 1, 1], [], []>} : vector<8x128xf32>, vector<128x128xf32>, vector<8x128xf32> -> vector<8x128xf32>
    %46 = arith.addf %44, %45 : vector<8x128xf32>
    %47 = math.tanh %46 : vector<8x128xf32>
    %48 = arith.truncf %47 : vector<8x128xf32> to vector<8x128xbf16>
    %49 = arith.index_cast %c3_i32 : i32 to index
    %c0_22 = arith.constant 0 : index
    %c0_23 = arith.constant 0 : index
    %50 = vector.load %arg4[%49, %c0_22, %c0_23] : memref<16x8x128xbf16, #tpu.memory_space<vmem>>, vector<1x8x128xbf16>
    %51 = vector.shape_cast %50 : vector<1x8x128xbf16> to vector<8x128xbf16>
    %52 = vector.shape_cast %48 : vector<8x128xbf16> to vector<1x8x128xbf16>
    tpu.vector_store %arg4[%49, %c0_22, %c0_23], %52 {strides = array<i32>} : memref<16x8x128xbf16, #tpu.memory_space<vmem>>, vector<1x8x128xbf16>,
    %c4_i32 = arith.constant 4 : i32
    %53 = arith.index_cast %c4_i32 : i32 to index
    %c0_24 = arith.constant 0 : index
    %c0_25 = arith.constant 0 : index
    %54 = vector.load %arg2[%53, %c0_24, %c0_25] : memref<16x8x128xbf16, #tpu.memory_space<vmem>>, vector<1x8x128xbf16>
    %55 = vector.shape_cast %54 : vector<1x8x128xbf16> to vector<8x128xbf16>
    %56 = arith.extf %55 : vector<8x128xbf16> to vector<8x128xf32>
    %cst_26 = arith.constant dense<0.000000e+00> : vector<8x128xf32>
    %57 = tpu.matmul %47, %3, %cst_26 {dimension_numbers = #tpu.dot_dimension_numbers<[1], [0], [0], [1], [0, 0, 1, 1], [], []>} : vector<8x128xf32>, vector<128x128xf32>, vector<8x128xf32> -> vector<8x128xf32>
    %58 = arith.addf %56, %57 : vector<8x128xf32>
    %59 = math.tanh %58 : vector<8x128xf32>
    %60 = arith.truncf %59 : vector<8x128xf32> to vector<8x128xbf16>
    %61 = arith.index_cast %c4_i32 : i32 to index
    %c0_27 = arith.constant 0 : index
    %c0_28 = arith.constant 0 : index
    %62 = vector.load %arg4[%61, %c0_27, %c0_28] : memref<16x8x128xbf16, #tpu.memory_space<vmem>>, vector<1x8x128xbf16>
    %63 = vector.shape_cast %62 : vector<1x8x128xbf16> to vector<8x128xbf16>
    %64 = vector.shape_cast %60 : vector<8x128xbf16> to vector<1x8x128xbf16>
    tpu.vector_store %arg4[%61, %c0_27, %c0_28], %64 {strides = array<i32>} : memref<16x8x128xbf16, #tpu.memory_space<vmem>>, vector<1x8x128xbf16>,
    %c5_i32 = arith.constant 5 : i32
    %65 = arith.index_cast %c5_i32 : i32 to index
    %c0_29 = arith.constant 0 : index
    %c0_30 = arith.constant 0 : index
    %66 = vector.load %arg2[%65, %c0_29, %c0_30] : memref<16x8x128xbf16, #tpu.memory_space<vmem>>, vector<1x8x128xbf16>
    %67 = vector.shape_cast %66 : vector<1x8x128xbf16> to vector<8x128xbf16>
    %68 = arith.extf %67 : vector<8x128xbf16> to vector<8x128xf32>
    %cst_31 = arith.constant dense<0.000000e+00> : vector<8x128xf32>
    %69 = tpu.matmul %59, %3, %cst_31 {dimension_numbers = #tpu.dot_dimension_numbers<[1], [0], [0], [1], [0, 0, 1, 1], [], []>} : vector<8x128xf32>, vector<128x128xf32>, vector<8x128xf32> -> vector<8x128xf32>
    %70 = arith.addf %68, %69 : vector<8x128xf32>
    %71 = math.tanh %70 : vector<8x128xf32>
    %72 = arith.truncf %71 : vector<8x128xf32> to vector<8x128xbf16>
    %73 = arith.index_cast %c5_i32 : i32 to index
    %c0_32 = arith.constant 0 : index
    %c0_33 = arith.constant 0 : index
    %74 = vector.load %arg4[%73, %c0_32, %c0_33] : memref<16x8x128xbf16, #tpu.memory_space<vmem>>, vector<1x8x128xbf16>
    %75 = vector.shape_cast %74 : vector<1x8x128xbf16> to vector<8x128xbf16>
    %76 = vector.shape_cast %72 : vector<8x128xbf16> to vector<1x8x128xbf16>
    tpu.vector_store %arg4[%73, %c0_32, %c0_33], %76 {strides = array<i32>} : memref<16x8x128xbf16, #tpu.memory_space<vmem>>, vector<1x8x128xbf16>,
    %c6_i32 = arith.constant 6 : i32
    %77 = arith.index_cast %c6_i32 : i32 to index
    %c0_34 = arith.constant 0 : index
    %c0_35 = arith.constant 0 : index
    %78 = vector.load %arg2[%77, %c0_34, %c0_35] : memref<16x8x128xbf16, #tpu.memory_space<vmem>>, vector<1x8x128xbf16>
    %79 = vector.shape_cast %78 : vector<1x8x128xbf16> to vector<8x128xbf16>
    %80 = arith.extf %79 : vector<8x128xbf16> to vector<8x128xf32>
    %cst_36 = arith.constant dense<0.000000e+00> : vector<8x128xf32>
    %81 = tpu.matmul %71, %3, %cst_36 {dimension_numbers = #tpu.dot_dimension_numbers<[1], [0], [0], [1], [0, 0, 1, 1], [], []>} : vector<8x128xf32>, vector<128x128xf32>, vector<8x128xf32> -> vector<8x128xf32>
    %82 = arith.addf %80, %81 : vector<8x128xf32>
    %83 = math.tanh %82 : vector<8x128xf32>
    %84 = arith.truncf %83 : vector<8x128xf32> to vector<8x128xbf16>
    %85 = arith.index_cast %c6_i32 : i32 to index
    %c0_37 = arith.constant 0 : index
    %c0_38 = arith.constant 0 : index
    %86 = vector.load %arg4[%85, %c0_37, %c0_38] : memref<16x8x128xbf16, #tpu.memory_space<vmem>>, vector<1x8x128xbf16>
    %87 = vector.shape_cast %86 : vector<1x8x128xbf16> to vector<8x128xbf16>
    %88 = vector.shape_cast %84 : vector<8x128xbf16> to vector<1x8x128xbf16>
    tpu.vector_store %arg4[%85, %c0_37, %c0_38], %88 {strides = array<i32>} : memref<16x8x128xbf16, #tpu.memory_space<vmem>>, vector<1x8x128xbf16>,
    %c7_i32 = arith.constant 7 : i32
    %89 = arith.index_cast %c7_i32 : i32 to index
    %c0_39 = arith.constant 0 : index
    %c0_40 = arith.constant 0 : index
    %90 = vector.load %arg2[%89, %c0_39, %c0_40] : memref<16x8x128xbf16, #tpu.memory_space<vmem>>, vector<1x8x128xbf16>
    %91 = vector.shape_cast %90 : vector<1x8x128xbf16> to vector<8x128xbf16>
    %92 = arith.extf %91 : vector<8x128xbf16> to vector<8x128xf32>
    %cst_41 = arith.constant dense<0.000000e+00> : vector<8x128xf32>
    %93 = tpu.matmul %83, %3, %cst_41 {dimension_numbers = #tpu.dot_dimension_numbers<[1], [0], [0], [1], [0, 0, 1, 1], [], []>} : vector<8x128xf32>, vector<128x128xf32>, vector<8x128xf32> -> vector<8x128xf32>
    %94 = arith.addf %92, %93 : vector<8x128xf32>
    %95 = math.tanh %94 : vector<8x128xf32>
    %96 = arith.truncf %95 : vector<8x128xf32> to vector<8x128xbf16>
    %97 = arith.index_cast %c7_i32 : i32 to index
    %c0_42 = arith.constant 0 : index
    %c0_43 = arith.constant 0 : index
    %98 = vector.load %arg4[%97, %c0_42, %c0_43] : memref<16x8x128xbf16, #tpu.memory_space<vmem>>, vector<1x8x128xbf16>
    %99 = vector.shape_cast %98 : vector<1x8x128xbf16> to vector<8x128xbf16>
    %100 = vector.shape_cast %96 : vector<8x128xbf16> to vector<1x8x128xbf16>
    tpu.vector_store %arg4[%97, %c0_42, %c0_43], %100 {strides = array<i32>} : memref<16x8x128xbf16, #tpu.memory_space<vmem>>, vector<1x8x128xbf16>,
    %c8_i32 = arith.constant 8 : i32
    %101 = arith.index_cast %c8_i32 : i32 to index
    %c0_44 = arith.constant 0 : index
    %c0_45 = arith.constant 0 : index
    %102 = vector.load %arg2[%101, %c0_44, %c0_45] : memref<16x8x128xbf16, #tpu.memory_space<vmem>>, vector<1x8x128xbf16>
    %103 = vector.shape_cast %102 : vector<1x8x128xbf16> to vector<8x128xbf16>
    %104 = arith.extf %103 : vector<8x128xbf16> to vector<8x128xf32>
    %cst_46 = arith.constant dense<0.000000e+00> : vector<8x128xf32>
    %105 = tpu.matmul %95, %3, %cst_46 {dimension_numbers = #tpu.dot_dimension_numbers<[1], [0], [0], [1], [0, 0, 1, 1], [], []>} : vector<8x128xf32>, vector<128x128xf32>, vector<8x128xf32> -> vector<8x128xf32>
    %106 = arith.addf %104, %105 : vector<8x128xf32>
    %107 = math.tanh %106 : vector<8x128xf32>
    %108 = arith.truncf %107 : vector<8x128xf32> to vector<8x128xbf16>
    %109 = arith.index_cast %c8_i32 : i32 to index
    %c0_47 = arith.constant 0 : index
    %c0_48 = arith.constant 0 : index
    %110 = vector.load %arg4[%109, %c0_47, %c0_48] : memref<16x8x128xbf16, #tpu.memory_space<vmem>>, vector<1x8x128xbf16>
    %111 = vector.shape_cast %110 : vector<1x8x128xbf16> to vector<8x128xbf16>
    %112 = vector.shape_cast %108 : vector<8x128xbf16> to vector<1x8x128xbf16>
    tpu.vector_store %arg4[%109, %c0_47, %c0_48], %112 {strides = array<i32>} : memref<16x8x128xbf16, #tpu.memory_space<vmem>>, vector<1x8x128xbf16>,
    %c9_i32 = arith.constant 9 : i32
    %113 = arith.index_cast %c9_i32 : i32 to index
    %c0_49 = arith.constant 0 : index
    %c0_50 = arith.constant 0 : index
    %114 = vector.load %arg2[%113, %c0_49, %c0_50] : memref<16x8x128xbf16, #tpu.memory_space<vmem>>, vector<1x8x128xbf16>
    %115 = vector.shape_cast %114 : vector<1x8x128xbf16> to vector<8x128xbf16>
    %116 = arith.extf %115 : vector<8x128xbf16> to vector<8x128xf32>
    %cst_51 = arith.constant dense<0.000000e+00> : vector<8x128xf32>
    %117 = tpu.matmul %107, %3, %cst_51 {dimension_numbers = #tpu.dot_dimension_numbers<[1], [0], [0], [1], [0, 0, 1, 1], [], []>} : vector<8x128xf32>, vector<128x128xf32>, vector<8x128xf32> -> vector<8x128xf32>
    %118 = arith.addf %116, %117 : vector<8x128xf32>
    %119 = math.tanh %118 : vector<8x128xf32>
    %120 = arith.truncf %119 : vector<8x128xf32> to vector<8x128xbf16>
    %121 = arith.index_cast %c9_i32 : i32 to index
    %c0_52 = arith.constant 0 : index
    %c0_53 = arith.constant 0 : index
    %122 = vector.load %arg4[%121, %c0_52, %c0_53] : memref<16x8x128xbf16, #tpu.memory_space<vmem>>, vector<1x8x128xbf16>
    %123 = vector.shape_cast %122 : vector<1x8x128xbf16> to vector<8x128xbf16>
    %124 = vector.shape_cast %120 : vector<8x128xbf16> to vector<1x8x128xbf16>
    tpu.vector_store %arg4[%121, %c0_52, %c0_53], %124 {strides = array<i32>} : memref<16x8x128xbf16, #tpu.memory_space<vmem>>, vector<1x8x128xbf16>,
    %c10_i32 = arith.constant 10 : i32
    %125 = arith.index_cast %c10_i32 : i32 to index
    %c0_54 = arith.constant 0 : index
    %c0_55 = arith.constant 0 : index
    %126 = vector.load %arg2[%125, %c0_54, %c0_55] : memref<16x8x128xbf16, #tpu.memory_space<vmem>>, vector<1x8x128xbf16>
    %127 = vector.shape_cast %126 : vector<1x8x128xbf16> to vector<8x128xbf16>
    %128 = arith.extf %127 : vector<8x128xbf16> to vector<8x128xf32>
    %cst_56 = arith.constant dense<0.000000e+00> : vector<8x128xf32>
    %129 = tpu.matmul %119, %3, %cst_56 {dimension_numbers = #tpu.dot_dimension_numbers<[1], [0], [0], [1], [0, 0, 1, 1], [], []>} : vector<8x128xf32>, vector<128x128xf32>, vector<8x128xf32> -> vector<8x128xf32>
    %130 = arith.addf %128, %129 : vector<8x128xf32>
    %131 = math.tanh %130 : vector<8x128xf32>
    %132 = arith.truncf %131 : vector<8x128xf32> to vector<8x128xbf16>
    %133 = arith.index_cast %c10_i32 : i32 to index
    %c0_57 = arith.constant 0 : index
    %c0_58 = arith.constant 0 : index
    %134 = vector.load %arg4[%133, %c0_57, %c0_58] : memref<16x8x128xbf16, #tpu.memory_space<vmem>>, vector<1x8x128xbf16>
    %135 = vector.shape_cast %134 : vector<1x8x128xbf16> to vector<8x128xbf16>
    %136 = vector.shape_cast %132 : vector<8x128xbf16> to vector<1x8x128xbf16>
    tpu.vector_store %arg4[%133, %c0_57, %c0_58], %136 {strides = array<i32>} : memref<16x8x128xbf16, #tpu.memory_space<vmem>>, vector<1x8x128xbf16>,
    %c11_i32 = arith.constant 11 : i32
    %137 = arith.index_cast %c11_i32 : i32 to index
    %c0_59 = arith.constant 0 : index
    %c0_60 = arith.constant 0 : index
    %138 = vector.load %arg2[%137, %c0_59, %c0_60] : memref<16x8x128xbf16, #tpu.memory_space<vmem>>, vector<1x8x128xbf16>
    %139 = vector.shape_cast %138 : vector<1x8x128xbf16> to vector<8x128xbf16>
    %140 = arith.extf %139 : vector<8x128xbf16> to vector<8x128xf32>
    %cst_61 = arith.constant dense<0.000000e+00> : vector<8x128xf32>
    %141 = tpu.matmul %131, %3, %cst_61 {dimension_numbers = #tpu.dot_dimension_numbers<[1], [0], [0], [1], [0, 0, 1, 1], [], []>} : vector<8x128xf32>, vector<128x128xf32>, vector<8x128xf32> -> vector<8x128xf32>
    %142 = arith.addf %140, %141 : vector<8x128xf32>
    %143 = math.tanh %142 : vector<8x128xf32>
    %144 = arith.truncf %143 : vector<8x128xf32> to vector<8x128xbf16>
    %145 = arith.index_cast %c11_i32 : i32 to index
    %c0_62 = arith.constant 0 : index
    %c0_63 = arith.constant 0 : index
    %146 = vector.load %arg4[%145, %c0_62, %c0_63] : memref<16x8x128xbf16, #tpu.memory_space<vmem>>, vector<1x8x128xbf16>
    %147 = vector.shape_cast %146 : vector<1x8x128xbf16> to vector<8x128xbf16>
    %148 = vector.shape_cast %144 : vector<8x128xbf16> to vector<1x8x128xbf16>
    tpu.vector_store %arg4[%145, %c0_62, %c0_63], %148 {strides = array<i32>} : memref<16x8x128xbf16, #tpu.memory_space<vmem>>, vector<1x8x128xbf16>,
    %c12_i32 = arith.constant 12 : i32
    %149 = arith.index_cast %c12_i32 : i32 to index
    %c0_64 = arith.constant 0 : index
    %c0_65 = arith.constant 0 : index
    %150 = vector.load %arg2[%149, %c0_64, %c0_65] : memref<16x8x128xbf16, #tpu.memory_space<vmem>>, vector<1x8x128xbf16>
    %151 = vector.shape_cast %150 : vector<1x8x128xbf16> to vector<8x128xbf16>
    %152 = arith.extf %151 : vector<8x128xbf16> to vector<8x128xf32>
    %cst_66 = arith.constant dense<0.000000e+00> : vector<8x128xf32>
    %153 = tpu.matmul %143, %3, %cst_66 {dimension_numbers = #tpu.dot_dimension_numbers<[1], [0], [0], [1], [0, 0, 1, 1], [], []>} : vector<8x128xf32>, vector<128x128xf32>, vector<8x128xf32> -> vector<8x128xf32>
    %154 = arith.addf %152, %153 : vector<8x128xf32>
    %155 = math.tanh %154 : vector<8x128xf32>
    %156 = arith.truncf %155 : vector<8x128xf32> to vector<8x128xbf16>
    %157 = arith.index_cast %c12_i32 : i32 to index
    %c0_67 = arith.constant 0 : index
    %c0_68 = arith.constant 0 : index
    %158 = vector.load %arg4[%157, %c0_67, %c0_68] : memref<16x8x128xbf16, #tpu.memory_space<vmem>>, vector<1x8x128xbf16>
    %159 = vector.shape_cast %158 : vector<1x8x128xbf16> to vector<8x128xbf16>
    %160 = vector.shape_cast %156 : vector<8x128xbf16> to vector<1x8x128xbf16>
    tpu.vector_store %arg4[%157, %c0_67, %c0_68], %160 {strides = array<i32>} : memref<16x8x128xbf16, #tpu.memory_space<vmem>>, vector<1x8x128xbf16>,
    %c13_i32 = arith.constant 13 : i32
    %161 = arith.index_cast %c13_i32 : i32 to index
    %c0_69 = arith.constant 0 : index
    %c0_70 = arith.constant 0 : index
    %162 = vector.load %arg2[%161, %c0_69, %c0_70] : memref<16x8x128xbf16, #tpu.memory_space<vmem>>, vector<1x8x128xbf16>
    %163 = vector.shape_cast %162 : vector<1x8x128xbf16> to vector<8x128xbf16>
    %164 = arith.extf %163 : vector<8x128xbf16> to vector<8x128xf32>
    %cst_71 = arith.constant dense<0.000000e+00> : vector<8x128xf32>
    %165 = tpu.matmul %155, %3, %cst_71 {dimension_numbers = #tpu.dot_dimension_numbers<[1], [0], [0], [1], [0, 0, 1, 1], [], []>} : vector<8x128xf32>, vector<128x128xf32>, vector<8x128xf32> -> vector<8x128xf32>
    %166 = arith.addf %164, %165 : vector<8x128xf32>
    %167 = math.tanh %166 : vector<8x128xf32>
    %168 = arith.truncf %167 : vector<8x128xf32> to vector<8x128xbf16>
    %169 = arith.index_cast %c13_i32 : i32 to index
    %c0_72 = arith.constant 0 : index
    %c0_73 = arith.constant 0 : index
    %170 = vector.load %arg4[%169, %c0_72, %c0_73] : memref<16x8x128xbf16, #tpu.memory_space<vmem>>, vector<1x8x128xbf16>
    %171 = vector.shape_cast %170 : vector<1x8x128xbf16> to vector<8x128xbf16>
    %172 = vector.shape_cast %168 : vector<8x128xbf16> to vector<1x8x128xbf16>
    tpu.vector_store %arg4[%169, %c0_72, %c0_73], %172 {strides = array<i32>} : memref<16x8x128xbf16, #tpu.memory_space<vmem>>, vector<1x8x128xbf16>,
    %c14_i32 = arith.constant 14 : i32
    %173 = arith.index_cast %c14_i32 : i32 to index
    %c0_74 = arith.constant 0 : index
    %c0_75 = arith.constant 0 : index
    %174 = vector.load %arg2[%173, %c0_74, %c0_75] : memref<16x8x128xbf16, #tpu.memory_space<vmem>>, vector<1x8x128xbf16>
    %175 = vector.shape_cast %174 : vector<1x8x128xbf16> to vector<8x128xbf16>
    %176 = arith.extf %175 : vector<8x128xbf16> to vector<8x128xf32>
    %cst_76 = arith.constant dense<0.000000e+00> : vector<8x128xf32>
    %177 = tpu.matmul %167, %3, %cst_76 {dimension_numbers = #tpu.dot_dimension_numbers<[1], [0], [0], [1], [0, 0, 1, 1], [], []>} : vector<8x128xf32>, vector<128x128xf32>, vector<8x128xf32> -> vector<8x128xf32>
    %178 = arith.addf %176, %177 : vector<8x128xf32>
    %179 = math.tanh %178 : vector<8x128xf32>
    %180 = arith.truncf %179 : vector<8x128xf32> to vector<8x128xbf16>
    %181 = arith.index_cast %c14_i32 : i32 to index
    %c0_77 = arith.constant 0 : index
    %c0_78 = arith.constant 0 : index
    %182 = vector.load %arg4[%181, %c0_77, %c0_78] : memref<16x8x128xbf16, #tpu.memory_space<vmem>>, vector<1x8x128xbf16>
    %183 = vector.shape_cast %182 : vector<1x8x128xbf16> to vector<8x128xbf16>
    %184 = vector.shape_cast %180 : vector<8x128xbf16> to vector<1x8x128xbf16>
    tpu.vector_store %arg4[%181, %c0_77, %c0_78], %184 {strides = array<i32>} : memref<16x8x128xbf16, #tpu.memory_space<vmem>>, vector<1x8x128xbf16>,
    %c15_i32 = arith.constant 15 : i32
    %185 = arith.index_cast %c15_i32 : i32 to index
    %c0_79 = arith.constant 0 : index
    %c0_80 = arith.constant 0 : index
    %186 = vector.load %arg2[%185, %c0_79, %c0_80] : memref<16x8x128xbf16, #tpu.memory_space<vmem>>, vector<1x8x128xbf16>
    %187 = vector.shape_cast %186 : vector<1x8x128xbf16> to vector<8x128xbf16>
    %188 = arith.extf %187 : vector<8x128xbf16> to vector<8x128xf32>
    %cst_81 = arith.constant dense<0.000000e+00> : vector<8x128xf32>
    %189 = tpu.matmul %179, %3, %cst_81 {dimension_numbers = #tpu.dot_dimension_numbers<[1], [0], [0], [1], [0, 0, 1, 1], [], []>} : vector<8x128xf32>, vector<128x128xf32>, vector<8x128xf32> -> vector<8x128xf32>
    %190 = arith.addf %188, %189 : vector<8x128xf32>
    %191 = math.tanh %190 : vector<8x128xf32>
    %192 = arith.truncf %191 : vector<8x128xf32> to vector<8x128xbf16>
    %193 = arith.index_cast %c15_i32 : i32 to index
    %c0_82 = arith.constant 0 : index
    %c0_83 = arith.constant 0 : index
    %194 = vector.load %arg4[%193, %c0_82, %c0_83] : memref<16x8x128xbf16, #tpu.memory_space<vmem>>, vector<1x8x128xbf16>
    %195 = vector.shape_cast %194 : vector<1x8x128xbf16> to vector<8x128xbf16>
    %196 = vector.shape_cast %192 : vector<8x128xbf16> to vector<1x8x128xbf16>
    tpu.vector_store %arg4[%193, %c0_82, %c0_83], %196 {strides = array<i32>} : memref<16x8x128xbf16, #tpu.memory_space<vmem>>, vector<1x8x128xbf16>,
    %c16_i32 = arith.constant 16 : i32
    %c0_84 = arith.constant 0 : index
    %c0_85 = arith.constant 0 : index
    %197 = vector.load %arg5[%c0_84, %c0_85] : memref<8x128xf32, #tpu.memory_space<vmem>>, vector<8x128xf32>
    tpu.vector_store %arg5[%c0_84, %c0_85], %191 {strides = array<i32>} : memref<8x128xf32, #tpu.memory_space<vmem>>, vector<8x128xf32>,
    return
  }
  func.func @transform_0(%arg0: i32, %arg1: i32) -> (i32, i32, i32) {
    %c0_i32 = arith.constant 0 : i32
    %c0_i32_0 = arith.constant 0 : i32
    return %arg1, %arg0, %c0_i32 : i32, i32, i32
  }
  func.func @transform_1(%arg0: i32, %arg1: i32) -> (i32, i32) {
    %c0_i32 = arith.constant 0 : i32
    %c0_i32_0 = arith.constant 0 : i32
    %c0_i32_1 = arith.constant 0 : i32
    return %c0_i32, %c0_i32_0 : i32, i32
  }
  func.func @transform_2(%arg0: i32, %arg1: i32) -> (i32, i32, i32) {
    %c0_i32 = arith.constant 0 : i32
    %c0_i32_0 = arith.constant 0 : i32
    return %arg1, %arg0, %c0_i32 : i32, i32, i32
  }
}

</mosaic_0001>

<llo_original>
// kernel: tpu_custom_call.1
$region0: #{tpu_custom_call.1}
  #allocation0 [shape = 'u32[]', space=smem, size = 0x4, offset = 0x4, fixed_abs, tag = 'smem constant byte address 0x4 - core index']
  #allocation1 [shape = 'u32[144,128]{1,0:T(1,128)}', space=vmem, size = 0x12000, scoped, tag = 'internal scratch']
  #allocation2 [shape = 'f32[8,128]{1,0:T(8,128)}', space=vmem, size = 0x1000, scoped, tag = 'scratch operand']
  %s0 = inlined_call_operand.hbm [shape: bf16[16,8,128], index: 0, kind: input, shape index: {}]
  %s1 = inlined_call_operand.hbm [shape: f32[128,128], index: 1, kind: input, shape index: {}]
  %s2 = inlined_call_operand.hbm [shape: bf16[16,8,128], index: 2, kind: output, shape index: {}]
  %s3 = sld [smem:[#allocation0]]
  $region30: #{tpu_custom_call.1} parent=0
    _
  %s5 = ssub.s32 1, %s3
  %s6 = scalar_select 0, %s5, %s3
  $region1: #{tpu_custom_call.1} parent=0
    #allocation3 [shape = 'u8[32768]{0}', space=vmem, size = 0x8000, scoped, tag = 'input window, operand 0, single buffered']
    #allocation4 [shape = 's32[1]{0}', space=sflag, size = 0x4, scoped, tag = 'scoped memory for tpu_custom_call.1']
    #allocation5 [shape = 's32[1]{0}', space=sflag, size = 0x4, scoped, tag = 'scoped memory for tpu_custom_call.1']
    #allocation6 [shape = 'u8[65536]{0}', space=vmem, size = 0x10000, scoped, tag = 'input window, operand 1, single buffered']
    #allocation7 [shape = 's32[1]{0}', space=sflag, size = 0x4, scoped, tag = 'scoped memory for tpu_custom_call.1']
    #allocation8 [shape = 'u8[32768]{0}', space=vmem, size = 0x8000, scoped, tag = 'output window, operand 0, single buffered']
    %7 = vsyncpa [#allocation4], 0
    %8 = vsyncpa [#allocation7], 0
    %9 = vsyncpa [#allocation5], 0
    // Predicated region
    $region2: #{tpu_custom_call.1} parent=1 // pred_check
      _
    $region3: #{tpu_custom_call.1} parent=1 // pred_check_branch
      %11 = sbr.rel (0) target = $region5
    $region4: #{tpu_custom_call.1} parent=1 // pred_region
      %s13 = ssub.s32 1024, 1024
      %14 = vsyncadd [#allocation4], %s13
      %s15 = sshll.u32 [#allocation3], 4
      %s16 = int_to_ptr.vmem [resolvable:$true] %s15
      %21 = dma.hbm_to_vmem [thread:$0]  %s0, 1024, %s16, [#allocation4], 64, 64, 4
    $region5: #{tpu_custom_call.1} parent=1 // pred_fallthru
      _
    // Predicated region
    $region6: #{tpu_custom_call.1} parent=1 // pred_check
      _
    $region7: #{tpu_custom_call.1} parent=1 // pred_check_branch
      %23 = sbr.rel (0) target = $region9
    $region8: #{tpu_custom_call.1} parent=1 // pred_region
      %s25 = ssub.s32 2048, 2048
      %26 = vsyncadd [#allocation7], %s25
      %s27 = sshll.u32 [#allocation6], 4
      %s28 = int_to_ptr.vmem [resolvable:$true] %s27
      %33 = dma.hbm_to_vmem [thread:$0]  %s1, 2048, %s28, [#allocation7], 128, 128, 8
    $region9: #{tpu_custom_call.1} parent=1 // pred_fallthru
      _
    // Predicated region
    $region10: #{tpu_custom_call.1} parent=1 // pred_check
      _
    $region11: #{tpu_custom_call.1} parent=1 // pred_check_branch
      %35 = sbr.rel (0) target = $region13
    $region12: #{tpu_custom_call.1} parent=1 // pred_region
      %36 = dma.done [#allocation4], 1024
    $region13: #{tpu_custom_call.1} parent=1 // pred_fallthru
      _
    // Predicated region
    $region14: #{tpu_custom_call.1} parent=1 // pred_check
      _
    $region15: #{tpu_custom_call.1} parent=1 // pred_check_branch
      %38 = sbr.rel (0) target = $region17
    $region16: #{tpu_custom_call.1} parent=1 // pred_region
      %39 = dma.done [#allocation7], 2048
    $region17: #{tpu_custom_call.1} parent=1 // pred_fallthru
      _
    %p40 = scmp.eq.s32.totalorder 0, 0
    // Predicated region
    $region18: #{tpu_custom_call.1} parent=1 // pred_check
      %p41 = pneg %p40
    $region19: #{tpu_custom_call.1} parent=1 // pred_check_branch
      %43 = sbr.rel (%p41) target = $region21
    $region20: #{tpu_custom_call.1} parent=1 // pred_region
      %44 = vst [vmem:[#allocation2] sm:$0xff] 0.0
    $region21: #{tpu_custom_call.1} parent=1 // pred_fallthru
      _
    %v45 = vld [vmem:[#allocation6] sm:$0xff]
    %v46 = vld [vmem:[#allocation6 + $0x8] sm:$0xff]
    %v47 = vld [vmem:[#allocation6 + $0x10] sm:$0xff]
    %v48 = vld [vmem:[#allocation6 + $0x18] sm:$0xff]
    %v49 = vld [vmem:[#allocation6 + $0x20] sm:$0xff]
    %v50 = vld [vmem:[#allocation6 + $0x28] sm:$0xff]
    %v51 = vld [vmem:[#allocation6 + $0x30] sm:$0xff]
    %v52 = vld [vmem:[#allocation6 + $0x38] sm:$0xff]
    %v53 = vld [vmem:[#allocation6 + $0x40] sm:$0xff]
    %v54 = vld [vmem:[#allocation6 + $0x48] sm:$0xff]
    %v55 = vld [vmem:[#allocation6 + $0x50] sm:$0xff]
    %v56 = vld [vmem:[#allocation6 + $0x58] sm:$0xff]
    %v57 = vld [vmem:[#allocation6 + $0x60] sm:$0xff]
    %v58 = vld [vmem:[#allocation6 + $0x68] sm:$0xff]
    %v59 = vld [vmem:[#allocation6 + $0x70] sm:$0xff]
    %v60 = vld [vmem:[#allocation6 + $0x78] sm:$0xff]
    %v61 = vld [vmem:[#allocation2] sm:$0xff]
    %v62 = vld [vmem:[#allocation3] sm:$0xf]
    %v63 = vunpack.c.l.bf16 %v62
    %64 = vmatprep.subr.mxu0 0.0
    %65 = vmatpush1.msra.mxu0 %v45
    %66 = vmatprep.subr.mxu0 0.0
    %67 = vmatpush1.msra.mxu0 %v46
    %68 = vmatprep.subr.mxu0 0.0
    %69 = vmatpush1.msra.mxu0 %v47
    %70 = vmatprep.subr.mxu0 0.0
    %71 = vmatpush1.msra.mxu0 %v48
    %72 = vmatprep.subr.mxu0 0.0
    %73 = vmatpush1.msra.mxu0 %v49
    %74 = vmatprep.subr.mxu0 0.0
    %75 = vmatpush1.msra.mxu0 %v50
    %76 = vmatprep.subr.mxu0 0.0
    %77 = vmatpush1.msra.mxu0 %v51
    %78 = vmatprep.subr.mxu0 0.0
    %79 = vmatpush1.msra.mxu0 %v52
    %80 = vmatprep.subr.mxu0 0.0
    %81 = vmatpush1.msra.mxu0 %v53
    %82 = vmatprep.subr.mxu0 0.0
    %83 = vmatpush1.msra.mxu0 %v54
    %84 = vmatprep.subr.mxu0 0.0
    %85 = vmatpush1.msra.mxu0 %v55
    %86 = vmatprep.subr.mxu0 0.0
    %87 = vmatpush1.msra.mxu0 %v56
    %88 = vmatprep.subr.mxu0 0.0
    %89 = vmatpush1.msra.mxu0 %v57
    %90 = vmatprep.subr.mxu0 0.0
    %91 = vmatpush1.msra.mxu0 %v58
    %92 = vmatprep.subr.mxu0 0.0
    %93 = vmatpush1.msra.mxu0 %v59
    %94 = vmatprep.subr.mxu0 0.0
    %95 = vmatpush1.msra.mxu0 %v60
    %96 = vmatprep.subr.mxu0 0.0
    %97 = vmatpush1.msra.mxu0 0.0
    %98 = vmatprep.subr.mxu0 0.0
    %99 = vmatpush1.msra.mxu0 0.0
    %100 = vmatprep.subr.mxu0 0.0
    %101 = vmatpush1.msra.mxu0 0.0
    %102 = vmatprep.subr.mxu0 0.0
    %103 = vmatpush1.msra.mxu0 0.0
    %104 = vmatprep.subr.mxu0 0.0
    %105 = vmatpush1.msra.mxu0 0.0
    %106 = vmatprep.subr.mxu0 0.0
    %107 = vmatpush1.msra.mxu0 0.0
    %108 = vmatprep.subr.mxu0 0.0
    %109 = vmatpush1.msra.mxu0 0.0
    %110 = vmatprep.subr.mxu0 0.0
    %111 = vmatpush1.msra.mxu0 0.0
    %112 = vmatprep.subr.mxu0 0.0
    %113 = vmatpush1.msra.mxu0 0.0
    %114 = vmatprep.subr.mxu0 0.0
    %115 = vmatpush1.msra.mxu0 0.0
    %116 = vmatprep.subr.mxu0 0.0
    %117 = vmatpush1.msra.mxu0 0.0
    %118 = vmatprep.subr.mxu0 0.0
    %119 = vmatpush1.msra.mxu0 0.0
    %120 = vmatprep.subr.mxu0 0.0
    %121 = vmatpush1.msra.mxu0 0.0
    %122 = vmatprep.subr.mxu0 0.0
    %123 = vmatpush1.msra.mxu0 0.0
    %124 = vmatprep.subr.mxu0 0.0
    %125 = vmatpush1.msra.mxu0 0.0
    %126 = vmatprep.subr.mxu0 0.0
    %127 = vmatpush1.msra.mxu0 0.0
    %128 = vmatprep.mubr.f32.mxu0 0.0
    %129 = vmatmul.mubr.f32.gmra.mrb[0].mxu0 %v61
    %v130 = vpop.f32.mrb[0].mxu0
    %v131 = vadd.f32 0.0, %v130
    %v132 = vpop.f32.mrb[0].mxu0
    %133 = vdwg.mxu0
    %v134 = vadd.f32 %v63, %v131
    %v135 = vtanh.pop %v134
    %v136 = vpack.c.bf16 %v135, %v135
    %137 = vst [vmem:[#allocation8] sm:$0xf] %v136
    %s138 = scalar_lea.vmem [#allocation3], 4
    %v139 = vld [vmem:[%s138] sm:$0xf]
    %v140 = vunpack.c.l.bf16 %v139
    %141 = vmatprep.subr.mxu0 0.0
    %142 = vmatpush1.msra.mxu0 %v45
    %143 = vmatprep.subr.mxu0 0.0
    %144 = vmatpush1.msra.mxu0 %v46
    %145 = vmatprep.subr.mxu0 0.0
    %146 = vmatpush1.msra.mxu0 %v47
    %147 = vmatprep.subr.mxu0 0.0
    %148 = vmatpush1.msra.mxu0 %v48
    %149 = vmatprep.subr.mxu0 0.0
    %150 = vmatpush1.msra.mxu0 %v49
    %151 = vmatprep.subr.mxu0 0.0
    %152 = vmatpush1.msra.mxu0 %v50
    %153 = vmatprep.subr.mxu0 0.0
    %154 = vmatpush1.msra.mxu0 %v51
    %155 = vmatprep.subr.mxu0 0.0
    %156 = vmatpush1.msra.mxu0 %v52
    %157 = vmatprep.subr.mxu0 0.0
    %158 = vmatpush1.msra.mxu0 %v53
    %159 = vmatprep.subr.mxu0 0.0
    %160 = vmatpush1.msra.mxu0 %v54
    %161 = vmatprep.subr.mxu0 0.0
    %162 = vmatpush1.msra.mxu0 %v55
    %163 = vmatprep.subr.mxu0 0.0
    %164 = vmatpush1.msra.mxu0 %v56
    %165 = vmatprep.subr.mxu0 0.0
    %166 = vmatpush1.msra.mxu0 %v57
    %167 = vmatprep.subr.mxu0 0.0
    %168 = vmatpush1.msra.mxu0 %v58
    %169 = vmatprep.subr.mxu0 0.0
    %170 = vmatpush1.msra.mxu0 %v59
    %171 = vmatprep.subr.mxu0 0.0
    %172 = vmatpush1.msra.mxu0 %v60
    %173 = vmatprep.subr.mxu0 0.0
    %174 = vmatpush1.msra.mxu0 0.0
    %175 = vmatprep.subr.mxu0 0.0
    %176 = vmatpush1.msra.mxu0 0.0
    %177 = vmatprep.subr.mxu0 0.0
    %178 = vmatpush1.msra.mxu0 0.0
    %179 = vmatprep.subr.mxu0 0.0
    %180 = vmatpush1.msra.mxu0 0.0
    %181 = vmatprep.subr.mxu0 0.0
    %182 = vmatpush1.msra.mxu0 0.0
    %183 = vmatprep.subr.mxu0 0.0
    %184 = vmatpush1.msra.mxu0 0.0
    %185 = vmatprep.subr.mxu0 0.0
    %186 = vmatpush1.msra.mxu0 0.0
    %187 = vmatprep.subr.mxu0 0.0
    %188 = vmatpush1.msra.mxu0 0.0
    %189 = vmatprep.subr.mxu0 0.0
    %190 = vmatpush1.msra.mxu0 0.0
    %191 = vmatprep.subr.mxu0 0.0
    %192 = vmatpush1.msra.mxu0 0.0
    %193 = vmatprep.subr.mxu0 0.0
    %194 = vmatpush1.msra.mxu0 0.0
    %195 = vmatprep.subr.mxu0 0.0
    %196 = vmatpush1.msra.mxu0 0.0
    %197 = vmatprep.subr.mxu0 0.0
    %198 = vmatpush1.msra.mxu0 0.0
    %199 = vmatprep.subr.mxu0 0.0
    %200 = vmatpush1.msra.mxu0 0.0
    %201 = vmatprep.subr.mxu0 0.0
    %202 = vmatpush1.msra.mxu0 0.0
    %203 = vmatprep.subr.mxu0 0.0
    %204 = vmatpush1.msra.mxu0 0.0
    %205 = vmatprep.mubr.f32.mxu0 0.0
    %206 = vmatmul.mubr.f32.gmra.mrb[0].mxu0 %v135
    %v207 = vpop.f32.mrb[0].mxu0
    %v208 = vadd.f32 0.0, %v207
    %v209 = vpop.f32.mrb[0].mxu0
    %210 = vdwg.mxu0
    %v211 = vadd.f32 %v140, %v208
    %v212 = vtanh.pop %v211
    %v213 = vpack.c.bf16 %v212, %v212
    %s214 = scalar_lea.vmem [#allocation8], 4
    %215 = vst [vmem:[%s214] sm:$0xf] %v213
    %s216 = scalar_lea.vmem [#allocation3], 8
    %v217 = vld [vmem:[%s216] sm:$0xf]
    %v218 = vunpack.c.l.bf16 %v217
    %219 = vmatprep.subr.mxu0 0.0
    %220 = vmatpush1.msra.mxu0 %v45
    %221 = vmatprep.subr.mxu0 0.0
    %222 = vmatpush1.msra.mxu0 %v46
    %223 = vmatprep.subr.mxu0 0.0
    %224 = vmatpush1.msra.mxu0 %v47
    %225 = vmatprep.subr.mxu0 0.0
    %226 = vmatpush1.msra.mxu0 %v48
    %227 = vmatprep.subr.mxu0 0.0
    %228 = vmatpush1.msra.mxu0 %v49
    %229 = vmatprep.subr.mxu0 0.0
    %230 = vmatpush1.msra.mxu0 %v50
    %231 = vmatprep.subr.mxu0 0.0
    %232 = vmatpush1.msra.mxu0 %v51
    %233 = vmatprep.subr.mxu0 0.0
    %234 = vmatpush1.msra.mxu0 %v52
    %235 = vmatprep.subr.mxu0 0.0
    %236 = vmatpush1.msra.mxu0 %v53
    %237 = vmatprep.subr.mxu0 0.0
    %238 = vmatpush1.msra.mxu0 %v54
    %239 = vmatprep.subr.mxu0 0.0
    %240 = vmatpush1.msra.mxu0 %v55
    %241 = vmatprep.subr.mxu0 0.0
    %242 = vmatpush1.msra.mxu0 %v56
    %243 = vmatprep.subr.mxu0 0.0
    %244 = vmatpush1.msra.mxu0 %v57
    %245 = vmatprep.subr.mxu0 0.0
    %246 = vmatpush1.msra.mxu0 %v58
    %247 = vmatprep.subr.mxu0 0.0
    %248 = vmatpush1.msra.mxu0 %v59
    %249 = vmatprep.subr.mxu0 0.0
    %250 = vmatpush1.msra.mxu0 %v60
    %251 = vmatprep.subr.mxu0 0.0
    %252 = vmatpush1.msra.mxu0 0.0
    %253 = vmatprep.subr.mxu0 0.0
    %254 = vmatpush1.msra.mxu0 0.0
    %255 = vmatprep.subr.mxu0 0.0
    %256 = vmatpush1.msra.mxu0 0.0
    %257 = vmatprep.subr.mxu0 0.0
    %258 = vmatpush1.msra.mxu0 0.0
    %259 = vmatprep.subr.mxu0 0.0
    %260 = vmatpush1.msra.mxu0 0.0
    %261 = vmatprep.subr.mxu0 0.0
    %262 = vmatpush1.msra.mxu0 0.0
    %263 = vmatprep.subr.mxu0 0.0
    %264 = vmatpush1.msra.mxu0 0.0
    %265 = vmatprep.subr.mxu0 0.0
    %266 = vmatpush1.msra.mxu0 0.0
    %267 = vmatprep.subr.mxu0 0.0
    %268 = vmatpush1.msra.mxu0 0.0
    %269 = vmatprep.subr.mxu0 0.0
    %270 = vmatpush1.msra.mxu0 0.0
    %271 = vmatprep.subr.mxu0 0.0
    %272 = vmatpush1.msra.mxu0 0.0
    %273 = vmatprep.subr.mxu0 0.0
    %274 = vmatpush1.msra.mxu0 0.0
    %275 = vmatprep.subr.mxu0 0.0
    %276 = vmatpush1.msra.mxu0 0.0
    %277 = vmatprep.subr.mxu0 0.0
    %278 = vmatpush1.msra.mxu0 0.0
    %279 = vmatprep.subr.mxu0 0.0
    %280 = vmatpush1.msra.mxu0 0.0
    %281 = vmatprep.subr.mxu0 0.0
    %282 = vmatpush1.msra.mxu0 0.0
    %283 = vmatprep.mubr.f32.mxu0 0.0
    %284 = vmatmul.mubr.f32.gmra.mrb[0].mxu0 %v212
    %v285 = vpop.f32.mrb[0].mxu0
    %v286 = vadd.f32 0.0, %v285
    %v287 = vpop.f32.mrb[0].mxu0
    %288 = vdwg.mxu0
    %v289 = vadd.f32 %v218, %v286
    %v290 = vtanh.pop %v289
    %v291 = vpack.c.bf16 %v290, %v290
    %s292 = scalar_lea.vmem [#allocation8], 8
    %293 = vst [vmem:[%s292] sm:$0xf] %v291
    %s294 = scalar_lea.vmem [#allocation3], 12
    %v295 = vld [vmem:[%s294] sm:$0xf]
    %v296 = vunpack.c.l.bf16 %v295
    %297 = vmatprep.subr.mxu0 0.0
    %298 = vmatpush1.msra.mxu0 %v45
    %299 = vmatprep.subr.mxu0 0.0
    %300 = vmatpush1.msra.mxu0 %v46
    %301 = vmatprep.subr.mxu0 0.0
    %302 = vmatpush1.msra.mxu0 %v47
    %303 = vmatprep.subr.mxu0 0.0
    %304 = vmatpush1.msra.mxu0 %v48
    %305 = vmatprep.subr.mxu0 0.0
    %306 = vmatpush1.msra.mxu0 %v49
    %307 = vmatprep.subr.mxu0 0.0
    %308 = vmatpush1.msra.mxu0 %v50
    %309 = vmatprep.subr.mxu0 0.0
    %310 = vmatpush1.msra.mxu0 %v51
    %311 = vmatprep.subr.mxu0 0.0
    %312 = vmatpush1.msra.mxu0 %v52
    %313 = vmatprep.subr.mxu0 0.0
    %314 = vmatpush1.msra.mxu0 %v53
    %315 = vmatprep.subr.mxu0 0.0
    %316 = vmatpush1.msra.mxu0 %v54
    %317 = vmatprep.subr.mxu0 0.0
    %318 = vmatpush1.msra.mxu0 %v55
    %319 = vmatprep.subr.mxu0 0.0
    %320 = vmatpush1.msra.mxu0 %v56
    %321 = vmatprep.subr.mxu0 0.0
    %322 = vmatpush1.msra.mxu0 %v57
    %323 = vmatprep.subr.mxu0 0.0
    %324 = vmatpush1.msra.mxu0 %v58
    %325 = vmatprep.subr.mxu0 0.0
    %326 = vmatpush1.msra.mxu0 %v59
    %327 = vmatprep.subr.mxu0 0.0
    %328 = vmatpush1.msra.mxu0 %v60
    %329 = vmatprep.subr.mxu0 0.0
    %330 = vmatpush1.msra.mxu0 0.0
    %331 = vmatprep.subr.mxu0 0.0
    %332 = vmatpush1.msra.mxu0 0.0
    %333 = vmatprep.subr.mxu0 0.0
    %334 = vmatpush1.msra.mxu0 0.0
    %335 = vmatprep.subr.mxu0 0.0
    %336 = vmatpush1.msra.mxu0 0.0
    %337 = vmatprep.subr.mxu0 0.0
    %338 = vmatpush1.msra.mxu0 0.0
    %339 = vmatprep.subr.mxu0 0.0
    %340 = vmatpush1.msra.mxu0 0.0
    %341 = vmatprep.subr.mxu0 0.0
    %342 = vmatpush1.msra.mxu0 0.0
    %343 = vmatprep.subr.mxu0 0.0
    %344 = vmatpush1.msra.mxu0 0.0
    %345 = vmatprep.subr.mxu0 0.0
    %346 = vmatpush1.msra.mxu0 0.0
    %347 = vmatprep.subr.mxu0 0.0
    %348 = vmatpush1.msra.mxu0 0.0
    %349 = vmatprep.subr.mxu0 0.0
    %350 = vmatpush1.msra.mxu0 0.0
    %351 = vmatprep.subr.mxu0 0.0
    %352 = vmatpush1.msra.mxu0 0.0
    %353 = vmatprep.subr.mxu0 0.0
    %354 = vmatpush1.msra.mxu0 0.0
    %355 = vmatprep.subr.mxu0 0.0
    %356 = vmatpush1.msra.mxu0 0.0
    %357 = vmatprep.subr.mxu0 0.0
    %358 = vmatpush1.msra.mxu0 0.0
    %359 = vmatprep.subr.mxu0 0.0
    %360 = vmatpush1.msra.mxu0 0.0
    %361 = vmatprep.mubr.f32.mxu0 0.0
    %362 = vmatmul.mubr.f32.gmra.mrb[0].mxu0 %v290
    %v363 = vpop.f32.mrb[0].mxu0
    %v364 = vadd.f32 0.0, %v363
    %v365 = vpop.f32.mrb[0].mxu0
    %366 = vdwg.mxu0
    %v367 = vadd.f32 %v296, %v364
    %v368 = vtanh.pop %v367
    %v369 = vpack.c.bf16 %v368, %v368
    %s370 = scalar_lea.vmem [#allocation8], 12
    %371 = vst [vmem:[%s370] sm:$0xf] %v369
    %s372 = scalar_lea.vmem [#allocation3], 16
    %v373 = vld [vmem:[%s372] sm:$0xf]
    %v374 = vunpack.c.l.bf16 %v373
    %375 = vmatprep.subr.mxu0 0.0
    %376 = vmatpush1.msra.mxu0 %v45
    %377 = vmatprep.subr.mxu0 0.0
    %378 = vmatpush1.msra.mxu0 %v46
    %379 = vmatprep.subr.mxu0 0.0
    %380 = vmatpush1.msra.mxu0 %v47
    %381 = vmatprep.subr.mxu0 0.0
    %382 = vmatpush1.msra.mxu0 %v48
    %383 = vmatprep.subr.mxu0 0.0
    %384 = vmatpush1.msra.mxu0 %v49
    %385 = vmatprep.subr.mxu0 0.0
    %386 = vmatpush1.msra.mxu0 %v50
    %387 = vmatprep.subr.mxu0 0.0
    %388 = vmatpush1.msra.mxu0 %v51
    %389 = vmatprep.subr.mxu0 0.0
    %390 = vmatpush1.msra.mxu0 %v52
    %391 = vmatprep.subr.mxu0 0.0
    %392 = vmatpush1.msra.mxu0 %v53
    %393 = vmatprep.subr.mxu0 0.0
    %394 = vmatpush1.msra.mxu0 %v54
    %395 = vmatprep.subr.mxu0 0.0
    %396 = vmatpush1.msra.mxu0 %v55
    %397 = vmatprep.subr.mxu0 0.0
    %398 = vmatpush1.msra.mxu0 %v56
    %399 = vmatprep.subr.mxu0 0.0
    %400 = vmatpush1.msra.mxu0 %v57
    %401 = vmatprep.subr.mxu0 0.0
    %402 = vmatpush1.msra.mxu0 %v58
    %403 = vmatprep.subr.mxu0 0.0
    %404 = vmatpush1.msra.mxu0 %v59
    %405 = vmatprep.subr.mxu0 0.0
    %406 = vmatpush1.msra.mxu0 %v60
    %407 = vmatprep.subr.mxu0 0.0
    %408 = vmatpush1.msra.mxu0 0.0
    %409 = vmatprep.subr.mxu0 0.0
    %410 = vmatpush1.msra.mxu0 0.0
    %411 = vmatprep.subr.mxu0 0.0
    %412 = vmatpush1.msra.mxu0 0.0
    %413 = vmatprep.subr.mxu0 0.0
    %414 = vmatpush1.msra.mxu0 0.0
    %415 = vmatprep.subr.mxu0 0.0
    %416 = vmatpush1.msra.mxu0 0.0
    %417 = vmatprep.subr.mxu0 0.0
    %418 = vmatpush1.msra.mxu0 0.0
    %419 = vmatprep.subr.mxu0 0.0
    %420 = vmatpush1.msra.mxu0 0.0
    %421 = vmatprep.subr.mxu0 0.0
    %422 = vmatpush1.msra.mxu0 0.0
    %423 = vmatprep.subr.mxu0 0.0
    %424 = vmatpush1.msra.mxu0 0.0
    %425 = vmatprep.subr.mxu0 0.0
    %426 = vmatpush1.msra.mxu0 0.0
    %427 = vmatprep.subr.mxu0 0.0
    %428 = vmatpush1.msra.mxu0 0.0
    %429 = vmatprep.subr.mxu0 0.0
    %430 = vmatpush1.msra.mxu0 0.0
    %431 = vmatprep.subr.mxu0 0.0
    %432 = vmatpush1.msra.mxu0 0.0
    %433 = vmatprep.subr.mxu0 0.0
    %434 = vmatpush1.msra.mxu0 0.0
    %435 = vmatprep.subr.mxu0 0.0
    %436 = vmatpush1.msra.mxu0 0.0
    %437 = vmatprep.subr.mxu0 0.0
    %438 = vmatpush1.msra.mxu0 0.0
    %439 = vmatprep.mubr.f32.mxu0 0.0
    %440 = vmatmul.mubr.f32.gmra.mrb[0].mxu0 %v368
    %v441 = vpop.f32.mrb[0].mxu0
    %v442 = vadd.f32 0.0, %v441
    %v443 = vpop.f32.mrb[0].mxu0
    %444 = vdwg.mxu0
    %v445 = vadd.f32 %v374, %v442
    %v446 = vtanh.pop %v445
    %v447 = vpack.c.bf16 %v446, %v446
    %s448 = scalar_lea.vmem [#allocation8], 16
    %449 = vst [vmem:[%s448] sm:$0xf] %v447
    %s450 = scalar_lea.vmem [#allocation3], 20
    %v451 = vld [vmem:[%s450] sm:$0xf]
    %v452 = vunpack.c.l.bf16 %v451
    %453 = vmatprep.subr.mxu0 0.0
    %454 = vmatpush1.msra.mxu0 %v45
    %455 = vmatprep.subr.mxu0 0.0
    %456 = vmatpush1.msra.mxu0 %v46
    %457 = vmatprep.subr.mxu0 0.0
    %458 = vmatpush1.msra.mxu0 %v47
    %459 = vmatprep.subr.mxu0 0.0
    %460 = vmatpush1.msra.mxu0 %v48
    %461 = vmatprep.subr.mxu0 0.0
    %462 = vmatpush1.msra.mxu0 %v49
    %463 = vmatprep.subr.mxu0 0.0
    %464 = vmatpush1.msra.mxu0 %v50
    %465 = vmatprep.subr.mxu0 0.0
    %466 = vmatpush1.msra.mxu0 %v51
    %467 = vmatprep.subr.mxu0 0.0
    %468 = vmatpush1.msra.mxu0 %v52
    %469 = vmatprep.subr.mxu0 0.0
    %470 = vmatpush1.msra.mxu0 %v53
    %471 = vmatprep.subr.mxu0 0.0
    %472 = vmatpush1.msra.mxu0 %v54
    %473 = vmatprep.subr.mxu0 0.0
    %474 = vmatpush1.msra.mxu0 %v55
    %475 = vmatprep.subr.mxu0 0.0
    %476 = vmatpush1.msra.mxu0 %v56
    %477 = vmatprep.subr.mxu0 0.0
    %478 = vmatpush1.msra.mxu0 %v57
    %479 = vmatprep.subr.mxu0 0.0
    %480 = vmatpush1.msra.mxu0 %v58
    %481 = vmatprep.subr.mxu0 0.0
    %482 = vmatpush1.msra.mxu0 %v59
    %483 = vmatprep.subr.mxu0 0.0
    %484 = vmatpush1.msra.mxu0 %v60
    %485 = vmatprep.subr.mxu0 0.0
    %486 = vmatpush1.msra.mxu0 0.0
    %487 = vmatprep.subr.mxu0 0.0
    %488 = vmatpush1.msra.mxu0 0.0
    %489 = vmatprep.subr.mxu0 0.0
    %490 = vmatpush1.msra.mxu0 0.0
    %491 = vmatprep.subr.mxu0 0.0
    %492 = vmatpush1.msra.mxu0 0.0
    %493 = vmatprep.subr.mxu0 0.0
    %494 = vmatpush1.msra.mxu0 0.0
    %495 = vmatprep.subr.mxu0 0.0
    %496 = vmatpush1.msra.mxu0 0.0
    %497 = vmatprep.subr.mxu0 0.0
    %498 = vmatpush1.msra.mxu0 0.0
    %499 = vmatprep.subr.mxu0 0.0
    %500 = vmatpush1.msra.mxu0 0.0
    %501 = vmatprep.subr.mxu0 0.0
    %502 = vmatpush1.msra.mxu0 0.0
    %503 = vmatprep.subr.mxu0 0.0
    %504 = vmatpush1.msra.mxu0 0.0
    %505 = vmatprep.subr.mxu0 0.0
    %506 = vmatpush1.msra.mxu0 0.0
    %507 = vmatprep.subr.mxu0 0.0
    %508 = vmatpush1.msra.mxu0 0.0
    %509 = vmatprep.subr.mxu0 0.0
    %510 = vmatpush1.msra.mxu0 0.0
    %511 = vmatprep.subr.mxu0 0.0
    %512 = vmatpush1.msra.mxu0 0.0
    %513 = vmatprep.subr.mxu0 0.0
    %514 = vmatpush1.msra.mxu0 0.0
    %515 = vmatprep.subr.mxu0 0.0
    %516 = vmatpush1.msra.mxu0 0.0
    %517 = vmatprep.mubr.f32.mxu0 0.0
    %518 = vmatmul.mubr.f32.gmra.mrb[0].mxu0 %v446
    %v519 = vpop.f32.mrb[0].mxu0
    %v520 = vadd.f32 0.0, %v519
    %v521 = vpop.f32.mrb[0].mxu0
    %522 = vdwg.mxu0
    %v523 = vadd.f32 %v452, %v520
    %v524 = vtanh.pop %v523
    %v525 = vpack.c.bf16 %v524, %v524
    %s526 = scalar_lea.vmem [#allocation8], 20
    %527 = vst [vmem:[%s526] sm:$0xf] %v525
    %s528 = scalar_lea.vmem [#allocation3], 24
    %v529 = vld [vmem:[%s528] sm:$0xf]
    %v530 = vunpack.c.l.bf16 %v529
    %531 = vmatprep.subr.mxu0 0.0
    %532 = vmatpush1.msra.mxu0 %v45
    %533 = vmatprep.subr.mxu0 0.0
    %534 = vmatpush1.msra.mxu0 %v46
    %535 = vmatprep.subr.mxu0 0.0
    %536 = vmatpush1.msra.mxu0 %v47
    %537 = vmatprep.subr.mxu0 0.0
    %538 = vmatpush1.msra.mxu0 %v48
    %539 = vmatprep.subr.mxu0 0.0
    %540 = vmatpush1.msra.mxu0 %v49
    %541 = vmatprep.subr.mxu0 0.0
    %542 = vmatpush1.msra.mxu0 %v50
    %543 = vmatprep.subr.mxu0 0.0
    %544 = vmatpush1.msra.mxu0 %v51
    %545 = vmatprep.subr.mxu0 0.0
    %546 = vmatpush1.msra.mxu0 %v52
    %547 = vmatprep.subr.mxu0 0.0
    %548 = vmatpush1.msra.mxu0 %v53
    %549 = vmatprep.subr.mxu0 0.0
    %550 = vmatpush1.msra.mxu0 %v54
    %551 = vmatprep.subr.mxu0 0.0
    %552 = vmatpush1.msra.mxu0 %v55
    %553 = vmatprep.subr.mxu0 0.0
    %554 = vmatpush1.msra.mxu0 %v56
    %555 = vmatprep.subr.mxu0 0.0
    %556 = vmatpush1.msra.mxu0 %v57
    %557 = vmatprep.subr.mxu0 0.0
    %558 = vmatpush1.msra.mxu0 %v58
    %559 = vmatprep.subr.mxu0 0.0
    %560 = vmatpush1.msra.mxu0 %v59
    %561 = vmatprep.subr.mxu0 0.0
    %562 = vmatpush1.msra.mxu0 %v60
    %563 = vmatprep.subr.mxu0 0.0
    %564 = vmatpush1.msra.mxu0 0.0
    %565 = vmatprep.subr.mxu0 0.0
    %566 = vmatpush1.msra.mxu0 0.0
    %567 = vmatprep.subr.mxu0 0.0
    %568 = vmatpush1.msra.mxu0 0.0
    %569 = vmatprep.subr.mxu0 0.0
    %570 = vmatpush1.msra.mxu0 0.0
    %571 = vmatprep.subr.mxu0 0.0
    %572 = vmatpush1.msra.mxu0 0.0
    %573 = vmatprep.subr.mxu0 0.0
    %574 = vmatpush1.msra.mxu0 0.0
    %575 = vmatprep.subr.mxu0 0.0
    %576 = vmatpush1.msra.mxu0 0.0
    %577 = vmatprep.subr.mxu0 0.0
    %578 = vmatpush1.msra.mxu0 0.0
    %579 = vmatprep.subr.mxu0 0.0
    %580 = vmatpush1.msra.mxu0 0.0
    %581 = vmatprep.subr.mxu0 0.0
    %582 = vmatpush1.msra.mxu0 0.0
    %583 = vmatprep.subr.mxu0 0.0
    %584 = vmatpush1.msra.mxu0 0.0
    %585 = vmatprep.subr.mxu0 0.0
    %586 = vmatpush1.msra.mxu0 0.0
    %587 = vmatprep.subr.mxu0 0.0
    %588 = vmatpush1.msra.mxu0 0.0
    %589 = vmatprep.subr.mxu0 0.0
    %590 = vmatpush1.msra.mxu0 0.0
    %591 = vmatprep.subr.mxu0 0.0
    %592 = vmatpush1.msra.mxu0 0.0
    %593 = vmatprep.subr.mxu0 0.0
    %594 = vmatpush1.msra.mxu0 0.0
    %595 = vmatprep.mubr.f32.mxu0 0.0
    %596 = vmatmul.mubr.f32.gmra.mrb[0].mxu0 %v524
    %v597 = vpop.f32.mrb[0].mxu0
    %v598 = vadd.f32 0.0, %v597
    %v599 = vpop.f32.mrb[0].mxu0
    %600 = vdwg.mxu0
    %v601 = vadd.f32 %v530, %v598
    %v602 = vtanh.pop %v601
    %v603 = vpack.c.bf16 %v602, %v602
    %s604 = scalar_lea.vmem [#allocation8], 24
    %605 = vst [vmem:[%s604] sm:$0xf] %v603
    %s606 = scalar_lea.vmem [#allocation3], 28
    %v607 = vld [vmem:[%s606] sm:$0xf]
    %v608 = vunpack.c.l.bf16 %v607
    %609 = vmatprep.subr.mxu0 0.0
    %610 = vmatpush1.msra.mxu0 %v45
    %611 = vmatprep.subr.mxu0 0.0
    %612 = vmatpush1.msra.mxu0 %v46
    %613 = vmatprep.subr.mxu0 0.0
    %614 = vmatpush1.msra.mxu0 %v47
    %615 = vmatprep.subr.mxu0 0.0
    %616 = vmatpush1.msra.mxu0 %v48
    %617 = vmatprep.subr.mxu0 0.0
    %618 = vmatpush1.msra.mxu0 %v49
    %619 = vmatprep.subr.mxu0 0.0
    %620 = vmatpush1.msra.mxu0 %v50
    %621 = vmatprep.subr.mxu0 0.0
    %622 = vmatpush1.msra.mxu0 %v51
    %623 = vmatprep.subr.mxu0 0.0
    %624 = vmatpush1.msra.mxu0 %v52
    %625 = vmatprep.subr.mxu0 0.0
    %626 = vmatpush1.msra.mxu0 %v53
    %627 = vmatprep.subr.mxu0 0.0
    %628 = vmatpush1.msra.mxu0 %v54
    %629 = vmatprep.subr.mxu0 0.0
    %630 = vmatpush1.msra.mxu0 %v55
    %631 = vmatprep.subr.mxu0 0.0
    %632 = vmatpush1.msra.mxu0 %v56
    %633 = vmatprep.subr.mxu0 0.0
    %634 = vmatpush1.msra.mxu0 %v57
    %635 = vmatprep.subr.mxu0 0.0
    %636 = vmatpush1.msra.mxu0 %v58
    %637 = vmatprep.subr.mxu0 0.0
    %638 = vmatpush1.msra.mxu0 %v59
    %639 = vmatprep.subr.mxu0 0.0
    %640 = vmatpush1.msra.mxu0 %v60
    %641 = vmatprep.subr.mxu0 0.0
    %642 = vmatpush1.msra.mxu0 0.0
    %643 = vmatprep.subr.mxu0 0.0
    %644 = vmatpush1.msra.mxu0 0.0
    %645 = vmatprep.subr.mxu0 0.0
    %646 = vmatpush1.msra.mxu0 0.0
    %647 = vmatprep.subr.mxu0 0.0
    %648 = vmatpush1.msra.mxu0 0.0
    %649 = vmatprep.subr.mxu0 0.0
    %650 = vmatpush1.msra.mxu0 0.0
    %651 = vmatprep.subr.mxu0 0.0
    %652 = vmatpush1.msra.mxu0 0.0
    %653 = vmatprep.subr.mxu0 0.0
    %654 = vmatpush1.msra.mxu0 0.0
    %655 = vmatprep.subr.mxu0 0.0
    %656 = vmatpush1.msra.mxu0 0.0
    %657 = vmatprep.subr.mxu0 0.0
    %658 = vmatpush1.msra.mxu0 0.0
    %659 = vmatprep.subr.mxu0 0.0
    %660 = vmatpush1.msra.mxu0 0.0
    %661 = vmatprep.subr.mxu0 0.0
    %662 = vmatpush1.msra.mxu0 0.0
    %663 = vmatprep.subr.mxu0 0.0
    %664 = vmatpush1.msra.mxu0 0.0
    %665 = vmatprep.subr.mxu0 0.0
    %666 = vmatpush1.msra.mxu0 0.0
    %667 = vmatprep.subr.mxu0 0.0
    %668 = vmatpush1.msra.mxu0 0.0
    %669 = vmatprep.subr.mxu0 0.0
    %670 = vmatpush1.msra.mxu0 0.0
    %671 = vmatprep.subr.mxu0 0.0
    %672 = vmatpush1.msra.mxu0 0.0
    %673 = vmatprep.mubr.f32.mxu0 0.0
    %674 = vmatmul.mubr.f32.gmra.mrb[0].mxu0 %v602
    %v675 = vpop.f32.mrb[0].mxu0
    %v676 = vadd.f32 0.0, %v675
    %v677 = vpop.f32.mrb[0].mxu0
    %678 = vdwg.mxu0
    %v679 = vadd.f32 %v608, %v676
    %v680 = vtanh.pop %v679
    %v681 = vpack.c.bf16 %v680, %v680
    %s682 = scalar_lea.vmem [#allocation8], 28
    %683 = vst [vmem:[%s682] sm:$0xf] %v681
    %s684 = scalar_lea.vmem [#allocation3], 32
    %v685 = vld [vmem:[%s684] sm:$0xf]
    %v686 = vunpack.c.l.bf16 %v685
    %687 = vmatprep.subr.mxu0 0.0
    %688 = vmatpush1.msra.mxu0 %v45
    %689 = vmatprep.subr.mxu0 0.0
    %690 = vmatpush1.msra.mxu0 %v46
    %691 = vmatprep.subr.mxu0 0.0
    %692 = vmatpush1.msra.mxu0 %v47
    %693 = vmatprep.subr.mxu0 0.0
    %694 = vmatpush1.msra.mxu0 %v48
    %695 = vmatprep.subr.mxu0 0.0
    %696 = vmatpush1.msra.mxu0 %v49
    %697 = vmatprep.subr.mxu0 0.0
    %698 = vmatpush1.msra.mxu0 %v50
    %699 = vmatprep.subr.mxu0 0.0
    %700 = vmatpush1.msra.mxu0 %v51
    %701 = vmatprep.subr.mxu0 0.0
    %702 = vmatpush1.msra.mxu0 %v52
    %703 = vmatprep.subr.mxu0 0.0
    %704 = vmatpush1.msra.mxu0 %v53
    %705 = vmatprep.subr.mxu0 0.0
    %706 = vmatpush1.msra.mxu0 %v54
    %707 = vmatprep.subr.mxu0 0.0
    %708 = vmatpush1.msra.mxu0 %v55
    %709 = vmatprep.subr.mxu0 0.0
    %710 = vmatpush1.msra.mxu0 %v56
    %711 = vmatprep.subr.mxu0 0.0
    %712 = vmatpush1.msra.mxu0 %v57
    %713 = vmatprep.subr.mxu0 0.0
    %714 = vmatpush1.msra.mxu0 %v58
    %715 = vmatprep.subr.mxu0 0.0
    %716 = vmatpush1.msra.mxu0 %v59
    %717 = vmatprep.subr.mxu0 0.0
    %718 = vmatpush1.msra.mxu0 %v60
    %719 = vmatprep.subr.mxu0 0.0
    %720 = vmatpush1.msra.mxu0 0.0
    %721 = vmatprep.subr.mxu0 0.0
    %722 = vmatpush1.msra.mxu0 0.0
    %723 = vmatprep.subr.mxu0 0.0
    %724 = vmatpush1.msra.mxu0 0.0
    %725 = vmatprep.subr.mxu0 0.0
    %726 = vmatpush1.msra.mxu0 0.0
    %727 = vmatprep.subr.mxu0 0.0
    %728 = vmatpush1.msra.mxu0 0.0
    %729 = vmatprep.subr.mxu0 0.0
    %730 = vmatpush1.msra.mxu0 0.0
    %731 = vmatprep.subr.mxu0 0.0
    %732 = vmatpush1.msra.mxu0 0.0
    %733 = vmatprep.subr.mxu0 0.0
    %734 = vmatpush1.msra.mxu0 0.0
    %735 = vmatprep.subr.mxu0 0.0
    %736 = vmatpush1.msra.mxu0 0.0
    %737 = vmatprep.subr.mxu0 0.0
    %738 = vmatpush1.msra.mxu0 0.0
    %739 = vmatprep.subr.mxu0 0.0
    %740 = vmatpush1.msra.mxu0 0.0
    %741 = vmatprep.subr.mxu0 0.0
    %742 = vmatpush1.msra.mxu0 0.0
    %743 = vmatprep.subr.mxu0 0.0
    %744 = vmatpush1.msra.mxu0 0.0
    %745 = vmatprep.subr.mxu0 0.0
    %746 = vmatpush1.msra.mxu0 0.0
    %747 = vmatprep.subr.mxu0 0.0
    %748 = vmatpush1.msra.mxu0 0.0
    %749 = vmatprep.subr.mxu0 0.0
    %750 = vmatpush1.msra.mxu0 0.0
    %751 = vmatprep.mubr.f32.mxu0 0.0
    %752 = vmatmul.mubr.f32.gmra.mrb[0].mxu0 %v680
    %v753 = vpop.f32.mrb[0].mxu0
    %v754 = vadd.f32 0.0, %v753
    %v755 = vpop.f32.mrb[0].mxu0
    %756 = vdwg.mxu0
    %v757 = vadd.f32 %v686, %v754
    %v758 = vtanh.pop %v757
    %v759 = vpack.c.bf16 %v758, %v758
    %s760 = scalar_lea.vmem [#allocation8], 32
    %761 = vst [vmem:[%s760] sm:$0xf] %v759
    %s762 = scalar_lea.vmem [#allocation3], 36
    %v763 = vld [vmem:[%s762] sm:$0xf]
    %v764 = vunpack.c.l.bf16 %v763
    %765 = vmatprep.subr.mxu0 0.0
    %766 = vmatpush1.msra.mxu0 %v45
    %767 = vmatprep.subr.mxu0 0.0
    %768 = vmatpush1.msra.mxu0 %v46
    %769 = vmatprep.subr.mxu0 0.0
    %770 = vmatpush1.msra.mxu0 %v47
    %771 = vmatprep.subr.mxu0 0.0
    %772 = vmatpush1.msra.mxu0 %v48
    %773 = vmatprep.subr.mxu0 0.0
    %774 = vmatpush1.msra.mxu0 %v49
    %775 = vmatprep.subr.mxu0 0.0
    %776 = vmatpush1.msra.mxu0 %v50
    %777 = vmatprep.subr.mxu0 0.0
    %778 = vmatpush1.msra.mxu0 %v51
    %779 = vmatprep.subr.mxu0 0.0
    %780 = vmatpush1.msra.mxu0 %v52
    %781 = vmatprep.subr.mxu0 0.0
    %782 = vmatpush1.msra.mxu0 %v53
    %783 = vmatprep.subr.mxu0 0.0
    %784 = vmatpush1.msra.mxu0 %v54
    %785 = vmatprep.subr.mxu0 0.0
    %786 = vmatpush1.msra.mxu0 %v55
    %787 = vmatprep.subr.mxu0 0.0
    %788 = vmatpush1.msra.mxu0 %v56
    %789 = vmatprep.subr.mxu0 0.0
    %790 = vmatpush1.msra.mxu0 %v57
    %791 = vmatprep.subr.mxu0 0.0
    %792 = vmatpush1.msra.mxu0 %v58
    %793 = vmatprep.subr.mxu0 0.0
    %794 = vmatpush1.msra.mxu0 %v59
    %795 = vmatprep.subr.mxu0 0.0
    %796 = vmatpush1.msra.mxu0 %v60
    %797 = vmatprep.subr.mxu0 0.0
    %798 = vmatpush1.msra.mxu0 0.0
    %799 = vmatprep.subr.mxu0 0.0
    %800 = vmatpush1.msra.mxu0 0.0
    %801 = vmatprep.subr.mxu0 0.0
    %802 = vmatpush1.msra.mxu0 0.0
    %803 = vmatprep.subr.mxu0 0.0
    %804 = vmatpush1.msra.mxu0 0.0
    %805 = vmatprep.subr.mxu0 0.0
    %806 = vmatpush1.msra.mxu0 0.0
    %807 = vmatprep.subr.mxu0 0.0
    %808 = vmatpush1.msra.mxu0 0.0
    %809 = vmatprep.subr.mxu0 0.0
    %810 = vmatpush1.msra.mxu0 0.0
    %811 = vmatprep.subr.mxu0 0.0
    %812 = vmatpush1.msra.mxu0 0.0
    %813 = vmatprep.subr.mxu0 0.0
    %814 = vmatpush1.msra.mxu0 0.0
    %815 = vmatprep.subr.mxu0 0.0
    %816 = vmatpush1.msra.mxu0 0.0
    %817 = vmatprep.subr.mxu0 0.0
    %818 = vmatpush1.msra.mxu0 0.0
    %819 = vmatprep.subr.mxu0 0.0
    %820 = vmatpush1.msra.mxu0 0.0
    %821 = vmatprep.subr.mxu0 0.0
    %822 = vmatpush1.msra.mxu0 0.0
    %823 = vmatprep.subr.mxu0 0.0
    %824 = vmatpush1.msra.mxu0 0.0
    %825 = vmatprep.subr.mxu0 0.0
    %826 = vmatpush1.msra.mxu0 0.0
    %827 = vmatprep.subr.mxu0 0.0
    %828 = vmatpush1.msra.mxu0 0.0
    %829 = vmatprep.mubr.f32.mxu0 0.0
    %830 = vmatmul.mubr.f32.gmra.mrb[0].mxu0 %v758
    %v831 = vpop.f32.mrb[0].mxu0
    %v832 = vadd.f32 0.0, %v831
    %v833 = vpop.f32.mrb[0].mxu0
    %834 = vdwg.mxu0
    %v835 = vadd.f32 %v764, %v832
    %v836 = vtanh.pop %v835
    %v837 = vpack.c.bf16 %v836, %v836
    %s838 = scalar_lea.vmem [#allocation8], 36
    %839 = vst [vmem:[%s838] sm:$0xf] %v837
    %s840 = scalar_lea.vmem [#allocation3], 40
    %v841 = vld [vmem:[%s840] sm:$0xf]
    %v842 = vunpack.c.l.bf16 %v841
    %843 = vmatprep.subr.mxu0 0.0
    %844 = vmatpush1.msra.mxu0 %v45
    %845 = vmatprep.subr.mxu0 0.0
    %846 = vmatpush1.msra.mxu0 %v46
    %847 = vmatprep.subr.mxu0 0.0
    %848 = vmatpush1.msra.mxu0 %v47
    %849 = vmatprep.subr.mxu0 0.0
    %850 = vmatpush1.msra.mxu0 %v48
    %851 = vmatprep.subr.mxu0 0.0
    %852 = vmatpush1.msra.mxu0 %v49
    %853 = vmatprep.subr.mxu0 0.0
    %854 = vmatpush1.msra.mxu0 %v50
    %855 = vmatprep.subr.mxu0 0.0
    %856 = vmatpush1.msra.mxu0 %v51
    %857 = vmatprep.subr.mxu0 0.0
    %858 = vmatpush1.msra.mxu0 %v52
    %859 = vmatprep.subr.mxu0 0.0
    %860 = vmatpush1.msra.mxu0 %v53
    %861 = vmatprep.subr.mxu0 0.0
    %862 = vmatpush1.msra.mxu0 %v54
    %863 = vmatprep.subr.mxu0 0.0
    %864 = vmatpush1.msra.mxu0 %v55
    %865 = vmatprep.subr.mxu0 0.0
    %866 = vmatpush1.msra.mxu0 %v56
    %867 = vmatprep.subr.mxu0 0.0
    %868 = vmatpush1.msra.mxu0 %v57
    %869 = vmatprep.subr.mxu0 0.0
    %870 = vmatpush1.msra.mxu0 %v58
    %871 = vmatprep.subr.mxu0 0.0
    %872 = vmatpush1.msra.mxu0 %v59
    %873 = vmatprep.subr.mxu0 0.0
    %874 = vmatpush1.msra.mxu0 %v60
    %875 = vmatprep.subr.mxu0 0.0
    %876 = vmatpush1.msra.mxu0 0.0
    %877 = vmatprep.subr.mxu0 0.0
    %878 = vmatpush1.msra.mxu0 0.0
    %879 = vmatprep.subr.mxu0 0.0
    %880 = vmatpush1.msra.mxu0 0.0
    %881 = vmatprep.subr.mxu0 0.0
    %882 = vmatpush1.msra.mxu0 0.0
    %883 = vmatprep.subr.mxu0 0.0
    %884 = vmatpush1.msra.mxu0 0.0
    %885 = vmatprep.subr.mxu0 0.0
    %886 = vmatpush1.msra.mxu0 0.0
    %887 = vmatprep.subr.mxu0 0.0
    %888 = vmatpush1.msra.mxu0 0.0
    %889 = vmatprep.subr.mxu0 0.0
    %890 = vmatpush1.msra.mxu0 0.0
    %891 = vmatprep.subr.mxu0 0.0
    %892 = vmatpush1.msra.mxu0 0.0
    %893 = vmatprep.subr.mxu0 0.0
    %894 = vmatpush1.msra.mxu0 0.0
    %895 = vmatprep.subr.mxu0 0.0
    %896 = vmatpush1.msra.mxu0 0.0
    %897 = vmatprep.subr.mxu0 0.0
    %898 = vmatpush1.msra.mxu0 0.0
    %899 = vmatprep.subr.mxu0 0.0
    %900 = vmatpush1.msra.mxu0 0.0
    %901 = vmatprep.subr.mxu0 0.0
    %902 = vmatpush1.msra.mxu0 0.0
    %903 = vmatprep.subr.mxu0 0.0
    %904 = vmatpush1.msra.mxu0 0.0
    %905 = vmatprep.subr.mxu0 0.0
    %906 = vmatpush1.msra.mxu0 0.0
    %907 = vmatprep.mubr.f32.mxu0 0.0
    %908 = vmatmul.mubr.f32.gmra.mrb[0].mxu0 %v836
    %v909 = vpop.f32.mrb[0].mxu0
    %v910 = vadd.f32 0.0, %v909
    %v911 = vpop.f32.mrb[0].mxu0
    %912 = vdwg.mxu0
    %v913 = vadd.f32 %v842, %v910
    %v914 = vtanh.pop %v913
    %v915 = vpack.c.bf16 %v914, %v914
    %s916 = scalar_lea.vmem [#allocation8], 40
    %917 = vst [vmem:[%s916] sm:$0xf] %v915
    %s918 = scalar_lea.vmem [#allocation3], 44
    %v919 = vld [vmem:[%s918] sm:$0xf]
    %v920 = vunpack.c.l.bf16 %v919
    %921 = vmatprep.subr.mxu0 0.0
    %922 = vmatpush1.msra.mxu0 %v45
    %923 = vmatprep.subr.mxu0 0.0
    %924 = vmatpush1.msra.mxu0 %v46
    %925 = vmatprep.subr.mxu0 0.0
    %926 = vmatpush1.msra.mxu0 %v47
    %927 = vmatprep.subr.mxu0 0.0
    %928 = vmatpush1.msra.mxu0 %v48
    %929 = vmatprep.subr.mxu0 0.0
    %930 = vmatpush1.msra.mxu0 %v49
    %931 = vmatprep.subr.mxu0 0.0
    %932 = vmatpush1.msra.mxu0 %v50
    %933 = vmatprep.subr.mxu0 0.0
    %934 = vmatpush1.msra.mxu0 %v51
    %935 = vmatprep.subr.mxu0 0.0
    %936 = vmatpush1.msra.mxu0 %v52
    %937 = vmatprep.subr.mxu0 0.0
    %938 = vmatpush1.msra.mxu0 %v53
    %939 = vmatprep.subr.mxu0 0.0
    %940 = vmatpush1.msra.mxu0 %v54
    %941 = vmatprep.subr.mxu0 0.0
    %942 = vmatpush1.msra.mxu0 %v55
    %943 = vmatprep.subr.mxu0 0.0
    %944 = vmatpush1.msra.mxu0 %v56
    %945 = vmatprep.subr.mxu0 0.0
    %946 = vmatpush1.msra.mxu0 %v57
    %947 = vmatprep.subr.mxu0 0.0
    %948 = vmatpush1.msra.mxu0 %v58
    %949 = vmatprep.subr.mxu0 0.0
    %950 = vmatpush1.msra.mxu0 %v59
    %951 = vmatprep.subr.mxu0 0.0
    %952 = vmatpush1.msra.mxu0 %v60
    %953 = vmatprep.subr.mxu0 0.0
    %954 = vmatpush1.msra.mxu0 0.0
    %955 = vmatprep.subr.mxu0 0.0
    %956 = vmatpush1.msra.mxu0 0.0
    %957 = vmatprep.subr.mxu0 0.0
    %958 = vmatpush1.msra.mxu0 0.0
    %959 = vmatprep.subr.mxu0 0.0
    %960 = vmatpush1.msra.mxu0 0.0
    %961 = vmatprep.subr.mxu0 0.0
    %962 = vmatpush1.msra.mxu0 0.0
    %963 = vmatprep.subr.mxu0 0.0
    %964 = vmatpush1.msra.mxu0 0.0
    %965 = vmatprep.subr.mxu0 0.0
    %966 = vmatpush1.msra.mxu0 0.0
    %967 = vmatprep.subr.mxu0 0.0
    %968 = vmatpush1.msra.mxu0 0.0
    %969 = vmatprep.subr.mxu0 0.0
    %970 = vmatpush1.msra.mxu0 0.0
    %971 = vmatprep.subr.mxu0 0.0
    %972 = vmatpush1.msra.mxu0 0.0
    %973 = vmatprep.subr.mxu0 0.0
    %974 = vmatpush1.msra.mxu0 0.0
    %975 = vmatprep.subr.mxu0 0.0
    %976 = vmatpush1.msra.mxu0 0.0
    %977 = vmatprep.subr.mxu0 0.0
    %978 = vmatpush1.msra.mxu0 0.0
    %979 = vmatprep.subr.mxu0 0.0
    %980 = vmatpush1.msra.mxu0 0.0
    %981 = vmatprep.subr.mxu0 0.0
    %982 = vmatpush1.msra.mxu0 0.0
    %983 = vmatprep.subr.mxu0 0.0
    %984 = vmatpush1.msra.mxu0 0.0
    %985 = vmatprep.mubr.f32.mxu0 0.0
    %986 = vmatmul.mubr.f32.gmra.mrb[0].mxu0 %v914
    %v987 = vpop.f32.mrb[0].mxu0
    %v988 = vadd.f32 0.0, %v987
    %v989 = vpop.f32.mrb[0].mxu0
    %990 = vdwg.mxu0
    %v991 = vadd.f32 %v920, %v988
    %v992 = vtanh.pop %v991
    %v993 = vpack.c.bf16 %v992, %v992
    %s994 = scalar_lea.vmem [#allocation8], 44
    %995 = vst [vmem:[%s994] sm:$0xf] %v993
    %s996 = scalar_lea.vmem [#allocation3], 48
    %v997 = vld [vmem:[%s996] sm:$0xf]
    %v998 = vunpack.c.l.bf16 %v997
    %999 = vmatprep.subr.mxu0 0.0
    %1000 = vmatpush1.msra.mxu0 %v45
    %1001 = vmatprep.subr.mxu0 0.0
    %1002 = vmatpush1.msra.mxu0 %v46
    %1003 = vmatprep.subr.mxu0 0.0
    %1004 = vmatpush1.msra.mxu0 %v47
    %1005 = vmatprep.subr.mxu0 0.0
    %1006 = vmatpush1.msra.mxu0 %v48
    %1007 = vmatprep.subr.mxu0 0.0
    %1008 = vmatpush1.msra.mxu0 %v49
    %1009 = vmatprep.subr.mxu0 0.0
    %1010 = vmatpush1.msra.mxu0 %v50
    %1011 = vmatprep.subr.mxu0 0.0
    %1012 = vmatpush1.msra.mxu0 %v51
    %1013 = vmatprep.subr.mxu0 0.0
    %1014 = vmatpush1.msra.mxu0 %v52
    %1015 = vmatprep.subr.mxu0 0.0
    %1016 = vmatpush1.msra.mxu0 %v53
    %1017 = vmatprep.subr.mxu0 0.0
    %1018 = vmatpush1.msra.mxu0 %v54
    %1019 = vmatprep.subr.mxu0 0.0
    %1020 = vmatpush1.msra.mxu0 %v55
    %1021 = vmatprep.subr.mxu0 0.0
    %1022 = vmatpush1.msra.mxu0 %v56
    %1023 = vmatprep.subr.mxu0 0.0
    %1024 = vmatpush1.msra.mxu0 %v57
    %1025 = vmatprep.subr.mxu0 0.0
    %1026 = vmatpush1.msra.mxu0 %v58
    %1027 = vmatprep.subr.mxu0 0.0
    %1028 = vmatpush1.msra.mxu0 %v59
    %1029 = vmatprep.subr.mxu0 0.0
    %1030 = vmatpush1.msra.mxu0 %v60
    %1031 = vmatprep.subr.mxu0 0.0
    %1032 = vmatpush1.msra.mxu0 0.0
    %1033 = vmatprep.subr.mxu0 0.0
    %1034 = vmatpush1.msra.mxu0 0.0
    %1035 = vmatprep.subr.mxu0 0.0
    %1036 = vmatpush1.msra.mxu0 0.0
    %1037 = vmatprep.subr.mxu0 0.0
    %1038 = vmatpush1.msra.mxu0 0.0
    %1039 = vmatprep.subr.mxu0 0.0
    %1040 = vmatpush1.msra.mxu0 0.0
    %1041 = vmatprep.subr.mxu0 0.0
    %1042 = vmatpush1.msra.mxu0 0.0
    %1043 = vmatprep.subr.mxu0 0.0
    %1044 = vmatpush1.msra.mxu0 0.0
    %1045 = vmatprep.subr.mxu0 0.0
    %1046 = vmatpush1.msra.mxu0 0.0
    %1047 = vmatprep.subr.mxu0 0.0
    %1048 = vmatpush1.msra.mxu0 0.0
    %1049 = vmatprep.subr.mxu0 0.0
    %1050 = vmatpush1.msra.mxu0 0.0
    %1051 = vmatprep.subr.mxu0 0.0
    %1052 = vmatpush1.msra.mxu0 0.0
    %1053 = vmatprep.subr.mxu0 0.0
    %1054 = vmatpush1.msra.mxu0 0.0
    %1055 = vmatprep.subr.mxu0 0.0
    %1056 = vmatpush1.msra.mxu0 0.0
    %1057 = vmatprep.subr.mxu0 0.0
    %1058 = vmatpush1.msra.mxu0 0.0
    %1059 = vmatprep.subr.mxu0 0.0
    %1060 = vmatpush1.msra.mxu0 0.0
    %1061 = vmatprep.subr.mxu0 0.0
    %1062 = vmatpush1.msra.mxu0 0.0
    %1063 = vmatprep.mubr.f32.mxu0 0.0
    %1064 = vmatmul.mubr.f32.gmra.mrb[0].mxu0 %v992
    %v1065 = vpop.f32.mrb[0].mxu0
    %v1066 = vadd.f32 0.0, %v1065
    %v1067 = vpop.f32.mrb[0].mxu0
    %1068 = vdwg.mxu0
    %v1069 = vadd.f32 %v998, %v1066
    %v1070 = vtanh.pop %v1069
    %v1071 = vpack.c.bf16 %v1070, %v1070
    %s1072 = scalar_lea.vmem [#allocation8], 48
    %1073 = vst [vmem:[%s1072] sm:$0xf] %v1071
    %s1074 = scalar_lea.vmem [#allocation3], 52
    %v1075 = vld [vmem:[%s1074] sm:$0xf]
    %v1076 = vunpack.c.l.bf16 %v1075
    %1077 = vmatprep.subr.mxu0 0.0
    %1078 = vmatpush1.msra.mxu0 %v45
    %1079 = vmatprep.subr.mxu0 0.0
    %1080 = vmatpush1.msra.mxu0 %v46
    %1081 = vmatprep.subr.mxu0 0.0
    %1082 = vmatpush1.msra.mxu0 %v47
    %1083 = vmatprep.subr.mxu0 0.0
    %1084 = vmatpush1.msra.mxu0 %v48
    %1085 = vmatprep.subr.mxu0 0.0
    %1086 = vmatpush1.msra.mxu0 %v49
    %1087 = vmatprep.subr.mxu0 0.0
    %1088 = vmatpush1.msra.mxu0 %v50
    %1089 = vmatprep.subr.mxu0 0.0
    %1090 = vmatpush1.msra.mxu0 %v51
    %1091 = vmatprep.subr.mxu0 0.0
    %1092 = vmatpush1.msra.mxu0 %v52
    %1093 = vmatprep.subr.mxu0 0.0
    %1094 = vmatpush1.msra.mxu0 %v53
    %1095 = vmatprep.subr.mxu0 0.0
    %1096 = vmatpush1.msra.mxu0 %v54
    %1097 = vmatprep.subr.mxu0 0.0
    %1098 = vmatpush1.msra.mxu0 %v55
    %1099 = vmatprep.subr.mxu0 0.0
    %1100 = vmatpush1.msra.mxu0 %v56
    %1101 = vmatprep.subr.mxu0 0.0
    %1102 = vmatpush1.msra.mxu0 %v57
    %1103 = vmatprep.subr.mxu0 0.0
    %1104 = vmatpush1.msra.mxu0 %v58
    %1105 = vmatprep.subr.mxu0 0.0
    %1106 = vmatpush1.msra.mxu0 %v59
    %1107 = vmatprep.subr.mxu0 0.0
    %1108 = vmatpush1.msra.mxu0 %v60
    %1109 = vmatprep.subr.mxu0 0.0
    %1110 = vmatpush1.msra.mxu0 0.0
    %1111 = vmatprep.subr.mxu0 0.0
    %1112 = vmatpush1.msra.mxu0 0.0
    %1113 = vmatprep.subr.mxu0 0.0
    %1114 = vmatpush1.msra.mxu0 0.0
    %1115 = vmatprep.subr.mxu0 0.0
    %1116 = vmatpush1.msra.mxu0 0.0
    %1117 = vmatprep.subr.mxu0 0.0
    %1118 = vmatpush1.msra.mxu0 0.0
    %1119 = vmatprep.subr.mxu0 0.0
    %1120 = vmatpush1.msra.mxu0 0.0
    %1121 = vmatprep.subr.mxu0 0.0
    %1122 = vmatpush1.msra.mxu0 0.0
    %1123 = vmatprep.subr.mxu0 0.0
    %1124 = vmatpush1.msra.mxu0 0.0
    %1125 = vmatprep.subr.mxu0 0.0
    %1126 = vmatpush1.msra.mxu0 0.0
    %1127 = vmatprep.subr.mxu0 0.0
    %1128 = vmatpush1.msra.mxu0 0.0
    %1129 = vmatprep.subr.mxu0 0.0
    %1130 = vmatpush1.msra.mxu0 0.0
    %1131 = vmatprep.subr.mxu0 0.0
    %1132 = vmatpush1.msra.mxu0 0.0
    %1133 = vmatprep.subr.mxu0 0.0
    %1134 = vmatpush1.msra.mxu0 0.0
    %1135 = vmatprep.subr.mxu0 0.0
    %1136 = vmatpush1.msra.mxu0 0.0
    %1137 = vmatprep.subr.mxu0 0.0
    %1138 = vmatpush1.msra.mxu0 0.0
    %1139 = vmatprep.subr.mxu0 0.0
    %1140 = vmatpush1.msra.mxu0 0.0
    %1141 = vmatprep.mubr.f32.mxu0 0.0
    %1142 = vmatmul.mubr.f32.gmra.mrb[0].mxu0 %v1070
    %v1143 = vpop.f32.mrb[0].mxu0
    %v1144 = vadd.f32 0.0, %v1143
    %v1145 = vpop.f32.mrb[0].mxu0
    %1146 = vdwg.mxu0
    %v1147 = vadd.f32 %v1076, %v1144
    %v1148 = vtanh.pop %v1147
    %v1149 = vpack.c.bf16 %v1148, %v1148
    %s1150 = scalar_lea.vmem [#allocation8], 52
    %1151 = vst [vmem:[%s1150] sm:$0xf] %v1149
    %s1152 = scalar_lea.vmem [#allocation3], 56
    %v1153 = vld [vmem:[%s1152] sm:$0xf]
    %v1154 = vunpack.c.l.bf16 %v1153
    %1155 = vmatprep.subr.mxu0 0.0
    %1156 = vmatpush1.msra.mxu0 %v45
    %1157 = vmatprep.subr.mxu0 0.0
    %1158 = vmatpush1.msra.mxu0 %v46
    %1159 = vmatprep.subr.mxu0 0.0
    %1160 = vmatpush1.msra.mxu0 %v47
    %1161 = vmatprep.subr.mxu0 0.0
    %1162 = vmatpush1.msra.mxu0 %v48
    %1163 = vmatprep.subr.mxu0 0.0
    %1164 = vmatpush1.msra.mxu0 %v49
    %1165 = vmatprep.subr.mxu0 0.0
    %1166 = vmatpush1.msra.mxu0 %v50
    %1167 = vmatprep.subr.mxu0 0.0
    %1168 = vmatpush1.msra.mxu0 %v51
    %1169 = vmatprep.subr.mxu0 0.0
    %1170 = vmatpush1.msra.mxu0 %v52
    %1171 = vmatprep.subr.mxu0 0.0
    %1172 = vmatpush1.msra.mxu0 %v53
    %1173 = vmatprep.subr.mxu0 0.0
    %1174 = vmatpush1.msra.mxu0 %v54
    %1175 = vmatprep.subr.mxu0 0.0
    %1176 = vmatpush1.msra.mxu0 %v55
    %1177 = vmatprep.subr.mxu0 0.0
    %1178 = vmatpush1.msra.mxu0 %v56
    %1179 = vmatprep.subr.mxu0 0.0
    %1180 = vmatpush1.msra.mxu0 %v57
    %1181 = vmatprep.subr.mxu0 0.0
    %1182 = vmatpush1.msra.mxu0 %v58
    %1183 = vmatprep.subr.mxu0 0.0
    %1184 = vmatpush1.msra.mxu0 %v59
    %1185 = vmatprep.subr.mxu0 0.0
    %1186 = vmatpush1.msra.mxu0 %v60
    %1187 = vmatprep.subr.mxu0 0.0
    %1188 = vmatpush1.msra.mxu0 0.0
    %1189 = vmatprep.subr.mxu0 0.0
    %1190 = vmatpush1.msra.mxu0 0.0
    %1191 = vmatprep.subr.mxu0 0.0
    %1192 = vmatpush1.msra.mxu0 0.0
    %1193 = vmatprep.subr.mxu0 0.0
    %1194 = vmatpush1.msra.mxu0 0.0
    %1195 = vmatprep.subr.mxu0 0.0
    %1196 = vmatpush1.msra.mxu0 0.0
    %1197 = vmatprep.subr.mxu0 0.0
    %1198 = vmatpush1.msra.mxu0 0.0
    %1199 = vmatprep.subr.mxu0 0.0
    %1200 = vmatpush1.msra.mxu0 0.0
    %1201 = vmatprep.subr.mxu0 0.0
    %1202 = vmatpush1.msra.mxu0 0.0
    %1203 = vmatprep.subr.mxu0 0.0
    %1204 = vmatpush1.msra.mxu0 0.0
    %1205 = vmatprep.subr.mxu0 0.0
    %1206 = vmatpush1.msra.mxu0 0.0
    %1207 = vmatprep.subr.mxu0 0.0
    %1208 = vmatpush1.msra.mxu0 0.0
    %1209 = vmatprep.subr.mxu0 0.0
    %1210 = vmatpush1.msra.mxu0 0.0
    %1211 = vmatprep.subr.mxu0 0.0
    %1212 = vmatpush1.msra.mxu0 0.0
    %1213 = vmatprep.subr.mxu0 0.0
    %1214 = vmatpush1.msra.mxu0 0.0
    %1215 = vmatprep.subr.mxu0 0.0
    %1216 = vmatpush1.msra.mxu0 0.0
    %1217 = vmatprep.subr.mxu0 0.0
    %1218 = vmatpush1.msra.mxu0 0.0
    %1219 = vmatprep.mubr.f32.mxu0 0.0
    %1220 = vmatmul.mubr.f32.gmra.mrb[0].mxu0 %v1148
    %v1221 = vpop.f32.mrb[0].mxu0
    %v1222 = vadd.f32 0.0, %v1221
    %v1223 = vpop.f32.mrb[0].mxu0
    %1224 = vdwg.mxu0
    %v1225 = vadd.f32 %v1154, %v1222
    %v1226 = vtanh.pop %v1225
    %v1227 = vpack.c.bf16 %v1226, %v1226
    %s1228 = scalar_lea.vmem [#allocation8], 56
    %1229 = vst [vmem:[%s1228] sm:$0xf] %v1227
    %s1230 = scalar_lea.vmem [#allocation3], 60
    %v1231 = vld [vmem:[%s1230] sm:$0xf]
    %v1232 = vunpack.c.l.bf16 %v1231
    %1233 = vmatprep.subr.mxu0 0.0
    %1234 = vmatpush1.msra.mxu0 %v45
    %1235 = vmatprep.subr.mxu0 0.0
    %1236 = vmatpush1.msra.mxu0 %v46
    %1237 = vmatprep.subr.mxu0 0.0
    %1238 = vmatpush1.msra.mxu0 %v47
    %1239 = vmatprep.subr.mxu0 0.0
    %1240 = vmatpush1.msra.mxu0 %v48
    %1241 = vmatprep.subr.mxu0 0.0
    %1242 = vmatpush1.msra.mxu0 %v49
    %1243 = vmatprep.subr.mxu0 0.0
    %1244 = vmatpush1.msra.mxu0 %v50
    %1245 = vmatprep.subr.mxu0 0.0
    %1246 = vmatpush1.msra.mxu0 %v51
    %1247 = vmatprep.subr.mxu0 0.0
    %1248 = vmatpush1.msra.mxu0 %v52
    %1249 = vmatprep.subr.mxu0 0.0
    %1250 = vmatpush1.msra.mxu0 %v53
    %1251 = vmatprep.subr.mxu0 0.0
    %1252 = vmatpush1.msra.mxu0 %v54
    %1253 = vmatprep.subr.mxu0 0.0
    %1254 = vmatpush1.msra.mxu0 %v55
    %1255 = vmatprep.subr.mxu0 0.0
    %1256 = vmatpush1.msra.mxu0 %v56
    %1257 = vmatprep.subr.mxu0 0.0
    %1258 = vmatpush1.msra.mxu0 %v57
    %1259 = vmatprep.subr.mxu0 0.0
    %1260 = vmatpush1.msra.mxu0 %v58
    %1261 = vmatprep.subr.mxu0 0.0
    %1262 = vmatpush1.msra.mxu0 %v59
    %1263 = vmatprep.subr.mxu0 0.0
    %1264 = vmatpush1.msra.mxu0 %v60
    %1265 = vmatprep.subr.mxu0 0.0
    %1266 = vmatpush1.msra.mxu0 0.0
    %1267 = vmatprep.subr.mxu0 0.0
    %1268 = vmatpush1.msra.mxu0 0.0
    %1269 = vmatprep.subr.mxu0 0.0
    %1270 = vmatpush1.msra.mxu0 0.0
    %1271 = vmatprep.subr.mxu0 0.0
    %1272 = vmatpush1.msra.mxu0 0.0
    %1273 = vmatprep.subr.mxu0 0.0
    %1274 = vmatpush1.msra.mxu0 0.0
    %1275 = vmatprep.subr.mxu0 0.0
    %1276 = vmatpush1.msra.mxu0 0.0
    %1277 = vmatprep.subr.mxu0 0.0
    %1278 = vmatpush1.msra.mxu0 0.0
    %1279 = vmatprep.subr.mxu0 0.0
    %1280 = vmatpush1.msra.mxu0 0.0
    %1281 = vmatprep.subr.mxu0 0.0
    %1282 = vmatpush1.msra.mxu0 0.0
    %1283 = vmatprep.subr.mxu0 0.0
    %1284 = vmatpush1.msra.mxu0 0.0
    %1285 = vmatprep.subr.mxu0 0.0
    %1286 = vmatpush1.msra.mxu0 0.0
    %1287 = vmatprep.subr.mxu0 0.0
    %1288 = vmatpush1.msra.mxu0 0.0
    %1289 = vmatprep.subr.mxu0 0.0
    %1290 = vmatpush1.msra.mxu0 0.0
    %1291 = vmatprep.subr.mxu0 0.0
    %1292 = vmatpush1.msra.mxu0 0.0
    %1293 = vmatprep.subr.mxu0 0.0
    %1294 = vmatpush1.msra.mxu0 0.0
    %1295 = vmatprep.subr.mxu0 0.0
    %1296 = vmatpush1.msra.mxu0 0.0
    %1297 = vmatprep.mubr.f32.mxu0 0.0
    %1298 = vmatmul.mubr.f32.gmra.mrb[0].mxu0 %v1226
    %v1299 = vpop.f32.mrb[0].mxu0
    %v1300 = vadd.f32 0.0, %v1299
    %v1301 = vpop.f32.mrb[0].mxu0
    %1302 = vdwg.mxu0
    %v1303 = vadd.f32 %v1232, %v1300
    %v1304 = vtanh.pop %v1303
    %v1305 = vpack.c.bf16 %v1304, %v1304
    %s1306 = scalar_lea.vmem [#allocation8], 60
    %1307 = vst [vmem:[%s1306] sm:$0xf] %v1305
    %1308 = vst [vmem:[#allocation2] sm:$0xff] %v1304
    // Predicated region
    $region22: #{tpu_custom_call.1} parent=1 // pred_check
      _
    $region23: #{tpu_custom_call.1} parent=1 // pred_check_branch
      %1310 = sbr.rel (0) target = $region25
    $region24: #{tpu_custom_call.1} parent=1 // pred_region
      %s1312 = ssub.s32 1024, 1024
      %1313 = vsyncadd [#allocation5], %s1312
      %s1314 = sshll.u32 [#allocation8], 4
      %s1315 = int_to_ptr.vmem [resolvable:$true] %s1314
      %1320 = dma.vmem_to_hbm [thread:$0]  %s1315, 1024, %s2, [#allocation5], 64, 64, 4
    $region25: #{tpu_custom_call.1} parent=1 // pred_fallthru
      _
    // Predicated region
    $region26: #{tpu_custom_call.1} parent=1 // pred_check
      _
    $region27: #{tpu_custom_call.1} parent=1 // pred_check_branch
      %1322 = sbr.rel (0) target = $region29
    $region28: #{tpu_custom_call.1} parent=1 // pred_region
      %1323 = dma.done [#allocation5], 1024
    $region29: #{tpu_custom_call.1} parent=1 // pred_fallthru
      _
    %1324 = vsyncpa [#allocation4], 1
    %1325 = vsyncpa [#allocation7], 1
    %1326 = vsyncpa [#allocation5], 1

</llo_original>
